<compile_context>
chip_gen: v7x
topology: tpu7x:2x2x1
jax: 0.10.0
libtpu: 0.0.40
codegen_flags: <defaults>
</compile_context>

<pallas_src>
import functools

import jax
import jax.numpy as jnp
from jax import lax
from jax.experimental import pallas as pl
from jax.experimental.pallas import tpu as pltpu


def _projnet_kernel(x_ref, w1_ref, b1_ref, w2_ref, b2_ref, o_ref, *, NB, H, WC, T):
    """All T residual blocks for NB batch elements, activation resident on-chip.

    x_ref : (NB*H, WC)      lane-dense activation rows  (WC = W * C)
    w*_ref: (T, 3*WC, WC)   block-banded dense conv weights, bf16 (kx taps folded)
    b*_ref: (T, 1, WC)      channel bias tiled across W, f32
    o_ref : (NB*H, WC)
    """
    NH = NB * H
    x = x_ref[...]                                                  # (NH, WC) f32

    # Row-within-image index: rows whose vertical neighbour would cross the
    # 'same' padding (or a batch-element boundary inside this block) get zeroed.
    row = lax.broadcasted_iota(jnp.int32, (NB, H, WC), 1).reshape(NH, WC)
    is_top = row == 0
    is_bot = row == H - 1

    def conv3x3(a, wmat_bf16, bias):
        # Vertical taps via XLU sublane rotations; wrapped rows masked to zero.
        up = jnp.where(is_top, 0.0, pltpu.roll(a, shift=1, axis=0))       # a[h-1]
        dn = jnp.where(is_bot, 0.0, pltpu.roll(a, shift=NH - 1, axis=0))  # a[h+1]
        # ky = 0,1,2 taps concatenated along lanes (each block is 128-aligned).
        patches = jnp.concatenate([up, a, dn], axis=1)                    # (NH, 3*WC)
        # One MXU matmul per conv: horizontal taps + horizontal padding live in
        # the bf16 block-banded weight; accumulate in f32.
        return jnp.dot(patches.astype(jnp.bfloat16), wmat_bf16,
                       preferred_element_type=jnp.float32) + bias

    # T is small and static: unroll the layer loop (all weights stay resident).
    for t in range(T):
        y = conv3x3(x, w1_ref[t], b1_ref[t])            # conv1 + bias
        y = jnp.maximum(y, 0.0)                         # ReLU
        y = conv3x3(y, w2_ref[t], b2_ref[t])            # conv2 + bias
        x = x + y                                       # residual add
    o_ref[...] = x


def _dense_conv_weight(w, W):
    """Fold kx taps + horizontal 'same' padding of a 3x3 conv into one matrix.

    w : (3, 3, Cin, Cout) = (ky, kx, ci, co)
    Returns M of shape (3*W*Cin, W*Cout) with
        M[ky, wi, ci, wo, co] = w[ky, wi - wo + 1, ci, co]  if |wi - wo| <= 1
                                0                            otherwise
    so that conv(x)[h, wo, co] = sum_ky x_rows[h + ky - 1, :] @ M[ky].
    """
    _, _, Ci, Co = w.shape
    M = jnp.zeros((3, W, Ci, W, Co), w.dtype)
    for wo in range(W):
        for kx in range(3):
            wi = wo + kx - 1
            if 0 <= wi < W:
                M = M.at[:, wi, :, wo, :].set(w[:, kx, :, :])
    return M.reshape(3 * W * Ci, W * Co)


def _pick_batch_block(N, H, target_rows=256):
    """Largest divisor of N with NB*H <= target_rows, keeping >=2 grid steps
    (when N >= 2) so both v7x TensorCores get work."""
    cap = max(1, target_rows // H)
    best = 1
    for nb in range(1, min(N, cap) + 1):
        if N % nb == 0 and (N < 2 or N // nb >= 2):
            best = nb
    return best


def projnet_m_forward(x_nchw, params):
    """ProjnetM.forward: X = X + layer[i](X) for i in range(T). NCHW in/out."""
    N, C, H, W = x_nchw.shape
    T = len(params)
    WC = W * C
    NB = _pick_batch_block(N, H)
    NH = NB * H

    # NCHW -> NHWC -> lane-dense flat rows (N*H, W*C).  With C=8, W=16 the last
    # dim is exactly 128 lanes -> unmasked vector loads / stores.
    x2 = jnp.transpose(x_nchw, (0, 2, 3, 1)).reshape(N * H, WC)

    # Pre-densify weights (bf16 for the MXU) / biases (f32) once.
    w1d = jnp.stack([_dense_conv_weight(w1, W) for (w1, _, _, _) in params]
                    ).astype(jnp.bfloat16)
    w2d = jnp.stack([_dense_conv_weight(w2, W) for (_, _, w2, _) in params]
                    ).astype(jnp.bfloat16)
    b1d = jnp.stack([jnp.tile(b1.reshape(1, C), (1, W)) for (_, b1, _, _) in params])
    b2d = jnp.stack([jnp.tile(b2.reshape(1, C), (1, W)) for (_, _, _, b2) in params])

    flops = 2 * T * 2 * (N * H) * (3 * WC) * WC
    bytes_accessed = (4 * 2 * x2.size                 # f32 activation in + out
                      + 2 * (w1d.size + w2d.size)     # bf16 weights
                      + 4 * (b1d.size + b2d.size))    # f32 biases

    kern = functools.partial(_projnet_kernel, NB=NB, H=H, WC=WC, T=T)
    out = pl.pallas_call(
        kern,
        out_shape=jax.ShapeDtypeStruct((N * H, WC), jnp.float32),
        grid_spec=pltpu.PrefetchScalarGridSpec(
            num_scalar_prefetch=0,
            grid=(N // NB,),
            in_specs=[
                pl.BlockSpec((NH, WC), lambda n: (n, 0)),
                # Constant index_maps -> fetched once across the whole grid.
                pl.BlockSpec((T, 3 * WC, WC), lambda n: (0, 0, 0)),
                pl.BlockSpec((T, 1, WC), lambda n: (0, 0, 0)),
                pl.BlockSpec((T, 3 * WC, WC), lambda n: (0, 0, 0)),
                pl.BlockSpec((T, 1, WC), lambda n: (0, 0, 0)),
            ],
            out_specs=pl.BlockSpec((NH, WC), lambda n: (n, 0)),
        ),
        compiler_params=pltpu.CompilerParams(
            dimension_semantics=("parallel",)),
        cost_estimate=pl.CostEstimate(
            flops=flops, transcendentals=0, bytes_accessed=bytes_accessed),
        input_output_aliases={0: 0},   # reuse the activation buffer for the output
    )(x2, w1d, b1d, w2d, b2d)

    # (N*H, W*C) -> NHWC -> NCHW
    return jnp.transpose(out.reshape(N, H, W, C), (0, 3, 1, 2))


def _ref_forward(x_nchw, params, quantize_bf16=False):
    """Pure-JAX reference (lax.conv) matching the PyTorch semantics.

    With quantize_bf16=True the conv operands are rounded to bf16 (f32 accum),
    matching the kernel's MXU precision so a tight tolerance still holds.
    """
    def q(a):
        return a.astype(jnp.bfloat16).astype(jnp.float32) if quantize_bf16 else a

    x = x_nchw
    for (w1, b1, w2, b2) in params:
        wk1 = q(jnp.transpose(w1, (3, 2, 0, 1)))     # (3,3,Ci,Co) -> (Co,Ci,3,3)
        wk2 = q(jnp.transpose(w2, (3, 2, 0, 1)))
        y = lax.conv_general_dilated(
            q(x), wk1, (1, 1), ((1, 1), (1, 1)),
            dimension_numbers=("NCHW", "OIHW", "NCHW"))
        y = y + b1.reshape(1, -1, 1, 1)
        y = jnp.maximum(y, 0.0)
        y = lax.conv_general_dilated(
            q(y), wk2, (1, 1), ((1, 1), (1, 1)),
            dimension_numbers=("NCHW", "OIHW", "NCHW"))
        y = y + b2.reshape(1, -1, 1, 1)
        x = x + y
    return x


if __name__ == "__main__":
    # Shapes consistent with ProjnetM(channel=8, T=2); N=8 exercises the batch
    # blocking (NB=4 -> two parallel grid steps, 64-row matmuls).
    N, C, H, W, T = 8, 8, 16, 16, 2

    key = jax.random.PRNGKey(0)
    keys = jax.random.split(key, 1 + 4 * T)
    x = jax.random.normal(keys[0], (N, C, H, W), jnp.float32)

    params = []
    for t in range(T):
        kw1, kb1, kw2, kb2 = keys[1 + 4 * t: 1 + 4 * (t + 1)]
        w1 = jax.random.normal(kw1, (3, 3, C, C), jnp.float32) * 0.1
        b1 = jax.random.normal(kb1, (1, C), jnp.float32) * 0.1
        w2 = jax.random.normal(kw2, (3, 3, C, C), jnp.float32) * 0.1
        b2 = jax.random.normal(kb2, (1, C), jnp.float32) * 0.1
        params.append((w1, b1, w2, b2))

    fwd = jax.jit(projnet_m_forward)
    out = jax.block_until_ready(fwd(x, params))

    # Precision-matched reference (bf16 conv operands, f32 accumulation).
    ref = _ref_forward(x, params, quantize_bf16=True)
    max_err = float(jnp.max(jnp.abs(out - ref)))
    assert jnp.allclose(out, ref, atol=1e-3, rtol=1e-3), max_err
    # Sanity check vs. the full-f32 reference (bf16 operand rounding ~1e-2).
    ref_f32 = _ref_forward(x, params, quantize_bf16=False)
    assert jnp.allclose(out, ref_f32, atol=5e-2, rtol=5e-2)
    print("KERNEL_OK")
</pallas_src>

<mosaic_0001>
module attributes {stable_mosaic.version = 11 : i64} {
  func.func @_projnet_kernel(%arg0: i32, %arg1: memref<64x128xf32, #tpu.memory_space<vmem>>, %arg2: memref<2x384x128xbf16, #tpu.memory_space<vmem>>, %arg3: memref<2x1x128xf32, #tpu.memory_space<vmem>>, %arg4: memref<2x384x128xbf16, #tpu.memory_space<vmem>>, %arg5: memref<2x1x128xf32, #tpu.memory_space<vmem>>, %arg6: memref<64x128xf32, #tpu.memory_space<vmem>>) attributes {dimension_semantics = [#tpu.dimension_semantics<parallel>], iteration_bounds = array<i64: 2>, scalar_prefetch = 0 : i64, scratch_operands = 0 : i64, tpu.core_type = #tpu.core_type<tc>, window_params = [{transform_indices = @transform_0, window_bounds = array<i64: 64, 128>}, {pipeline_mode = #tpu.pipeline_mode<synchronous>, transform_indices = @transform_1, window_bounds = array<i64: 2, 384, 128>}, {pipeline_mode = #tpu.pipeline_mode<synchronous>, transform_indices = @transform_2, window_bounds = array<i64: 2, 1, 128>}, {pipeline_mode = #tpu.pipeline_mode<synchronous>, transform_indices = @transform_3, window_bounds = array<i64: 2, 384, 128>}, {pipeline_mode = #tpu.pipeline_mode<synchronous>, transform_indices = @transform_4, window_bounds = array<i64: 2, 1, 128>}, {transform_indices = @transform_5, window_bounds = array<i64: 64, 128>}]} {
    %c0 = arith.constant 0 : index
    %c0_0 = arith.constant 0 : index
    %0 = vector.load %arg1[%c0, %c0_0] : memref<64x128xf32, #tpu.memory_space<vmem>>, vector<64x128xf32>
    %1 = tpu.iota {dimensions = array<i32: 1>} : vector<4x16x128xi32>
    %2 = vector.shape_cast %1 : vector<4x16x128xi32> to vector<64x128xi32>
    %c0_i32 = arith.constant 0 : i32
    %3 = vector.broadcast %c0_i32 : i32 to vector<64x128xi32>
    %4 = arith.cmpi eq, %2, %3 : vector<64x128xi32>
    %c15_i32 = arith.constant 15 : i32
    %5 = vector.broadcast %c15_i32 : i32 to vector<64x128xi32>
    %6 = arith.cmpi eq, %2, %5 : vector<64x128xi32>
    %c0_1 = arith.constant 0 : index
    %c0_2 = arith.constant 0 : index
    %c0_3 = arith.constant 0 : index
    %7 = vector.load %arg2[%c0_1, %c0_2, %c0_3] : memref<2x384x128xbf16, #tpu.memory_space<vmem>>, vector<1x384x128xbf16>
    %8 = vector.shape_cast %7 : vector<1x384x128xbf16> to vector<384x128xbf16>
    %c0_4 = arith.constant 0 : index
    %c0_5 = arith.constant 0 : index
    %c0_6 = arith.constant 0 : index
    %9 = vector.load %arg3[%c0_4, %c0_5, %c0_6] : memref<2x1x128xf32, #tpu.memory_space<vmem>>, vector<1x1x128xf32>
    %10 = vector.shape_cast %9 : vector<1x1x128xf32> to vector<1x128xf32>
    %c1_i32 = arith.constant 1 : i32
    %11 = tpu.dynamic_rotate %0 by %c1_i32 dim 0 : vector<64x128xf32>, i32 -> vector<64x128xf32>
    %cst = arith.constant 0.000000e+00 : f32
    %12 = vector.broadcast %cst : f32 to vector<64x128xf32>
    %13 = arith.select %4, %12, %11 : vector<64x128xi1>, vector<64x128xf32>
    %c63_i32 = arith.constant 63 : i32
    %14 = tpu.dynamic_rotate %0 by %c63_i32 dim 0 : vector<64x128xf32>, i32 -> vector<64x128xf32>
    %cst_7 = arith.constant 0.000000e+00 : f32
    %15 = vector.broadcast %cst_7 : f32 to vector<64x128xf32>
    %16 = arith.select %6, %15, %14 : vector<64x128xi1>, vector<64x128xf32>
    %17 = tpu.concatenate %13, %0, %16 in 1 : vector<64x128xf32>, vector<64x128xf32>, vector<64x128xf32> -> vector<64x384xf32>
    %18 = arith.truncf %17 : vector<64x384xf32> to vector<64x384xbf16>
    %cst_8 = arith.constant dense<0.000000e+00> : vector<64x128xf32>
    %19 = tpu.matmul %18, %8, %cst_8 {dimension_numbers = #tpu.dot_dimension_numbers<[1], [0], [0], [1], [0, 0, 1, 1], [], []>} : vector<64x384xbf16>, vector<384x128xbf16>, vector<64x128xf32> -> vector<64x128xf32>
    %20 = vector.broadcast %10 : vector<1x128xf32> to vector<64x128xf32>
    %21 = arith.addf %19, %20 : vector<64x128xf32>
    %cst_9 = arith.constant 0.000000e+00 : f32
    %22 = vector.broadcast %cst_9 : f32 to vector<64x128xf32>
    %23 = arith.maximumf %21, %22 : vector<64x128xf32>
    %c0_10 = arith.constant 0 : index
    %c0_11 = arith.constant 0 : index
    %c0_12 = arith.constant 0 : index
    %24 = vector.load %arg4[%c0_10, %c0_11, %c0_12] : memref<2x384x128xbf16, #tpu.memory_space<vmem>>, vector<1x384x128xbf16>
    %25 = vector.shape_cast %24 : vector<1x384x128xbf16> to vector<384x128xbf16>
    %c0_13 = arith.constant 0 : index
    %c0_14 = arith.constant 0 : index
    %c0_15 = arith.constant 0 : index
    %26 = vector.load %arg5[%c0_13, %c0_14, %c0_15] : memref<2x1x128xf32, #tpu.memory_space<vmem>>, vector<1x1x128xf32>
    %27 = vector.shape_cast %26 : vector<1x1x128xf32> to vector<1x128xf32>
    %c1_i32_16 = arith.constant 1 : i32
    %28 = tpu.dynamic_rotate %23 by %c1_i32_16 dim 0 : vector<64x128xf32>, i32 -> vector<64x128xf32>
    %cst_17 = arith.constant 0.000000e+00 : f32
    %29 = vector.broadcast %cst_17 : f32 to vector<64x128xf32>
    %30 = arith.select %4, %29, %28 : vector<64x128xi1>, vector<64x128xf32>
    %c63_i32_18 = arith.constant 63 : i32
    %31 = tpu.dynamic_rotate %23 by %c63_i32_18 dim 0 : vector<64x128xf32>, i32 -> vector<64x128xf32>
    %cst_19 = arith.constant 0.000000e+00 : f32
    %32 = vector.broadcast %cst_19 : f32 to vector<64x128xf32>
    %33 = arith.select %6, %32, %31 : vector<64x128xi1>, vector<64x128xf32>
    %34 = tpu.concatenate %30, %23, %33 in 1 : vector<64x128xf32>, vector<64x128xf32>, vector<64x128xf32> -> vector<64x384xf32>
    %35 = arith.truncf %34 : vector<64x384xf32> to vector<64x384xbf16>
    %cst_20 = arith.constant dense<0.000000e+00> : vector<64x128xf32>
    %36 = tpu.matmul %35, %25, %cst_20 {dimension_numbers = #tpu.dot_dimension_numbers<[1], [0], [0], [1], [0, 0, 1, 1], [], []>} : vector<64x384xbf16>, vector<384x128xbf16>, vector<64x128xf32> -> vector<64x128xf32>
    %37 = vector.broadcast %27 : vector<1x128xf32> to vector<64x128xf32>
    %38 = arith.addf %36, %37 : vector<64x128xf32>
    %39 = arith.addf %0, %38 : vector<64x128xf32>
    %c1 = arith.constant 1 : index
    %c0_21 = arith.constant 0 : index
    %c0_22 = arith.constant 0 : index
    %40 = vector.load %arg2[%c1, %c0_21, %c0_22] : memref<2x384x128xbf16, #tpu.memory_space<vmem>>, vector<1x384x128xbf16>
    %41 = vector.shape_cast %40 : vector<1x384x128xbf16> to vector<384x128xbf16>
    %c1_23 = arith.constant 1 : index
    %c0_24 = arith.constant 0 : index
    %c0_25 = arith.constant 0 : index
    %42 = vector.load %arg3[%c1_23, %c0_24, %c0_25] : memref<2x1x128xf32, #tpu.memory_space<vmem>>, vector<1x1x128xf32>
    %43 = vector.shape_cast %42 : vector<1x1x128xf32> to vector<1x128xf32>
    %c1_i32_26 = arith.constant 1 : i32
    %44 = tpu.dynamic_rotate %39 by %c1_i32_26 dim 0 : vector<64x128xf32>, i32 -> vector<64x128xf32>
    %cst_27 = arith.constant 0.000000e+00 : f32
    %45 = vector.broadcast %cst_27 : f32 to vector<64x128xf32>
    %46 = arith.select %4, %45, %44 : vector<64x128xi1>, vector<64x128xf32>
    %c63_i32_28 = arith.constant 63 : i32
    %47 = tpu.dynamic_rotate %39 by %c63_i32_28 dim 0 : vector<64x128xf32>, i32 -> vector<64x128xf32>
    %cst_29 = arith.constant 0.000000e+00 : f32
    %48 = vector.broadcast %cst_29 : f32 to vector<64x128xf32>
    %49 = arith.select %6, %48, %47 : vector<64x128xi1>, vector<64x128xf32>
    %50 = tpu.concatenate %46, %39, %49 in 1 : vector<64x128xf32>, vector<64x128xf32>, vector<64x128xf32> -> vector<64x384xf32>
    %51 = arith.truncf %50 : vector<64x384xf32> to vector<64x384xbf16>
    %cst_30 = arith.constant dense<0.000000e+00> : vector<64x128xf32>
    %52 = tpu.matmul %51, %41, %cst_30 {dimension_numbers = #tpu.dot_dimension_numbers<[1], [0], [0], [1], [0, 0, 1, 1], [], []>} : vector<64x384xbf16>, vector<384x128xbf16>, vector<64x128xf32> -> vector<64x128xf32>
    %53 = vector.broadcast %43 : vector<1x128xf32> to vector<64x128xf32>
    %54 = arith.addf %52, %53 : vector<64x128xf32>
    %cst_31 = arith.constant 0.000000e+00 : f32
    %55 = vector.broadcast %cst_31 : f32 to vector<64x128xf32>
    %56 = arith.maximumf %54, %55 : vector<64x128xf32>
    %c1_32 = arith.constant 1 : index
    %c0_33 = arith.constant 0 : index
    %c0_34 = arith.constant 0 : index
    %57 = vector.load %arg4[%c1_32, %c0_33, %c0_34] : memref<2x384x128xbf16, #tpu.memory_space<vmem>>, vector<1x384x128xbf16>
    %58 = vector.shape_cast %57 : vector<1x384x128xbf16> to vector<384x128xbf16>
    %c1_35 = arith.constant 1 : index
    %c0_36 = arith.constant 0 : index
    %c0_37 = arith.constant 0 : index
    %59 = vector.load %arg5[%c1_35, %c0_36, %c0_37] : memref<2x1x128xf32, #tpu.memory_space<vmem>>, vector<1x1x128xf32>
    %60 = vector.shape_cast %59 : vector<1x1x128xf32> to vector<1x128xf32>
    %c1_i32_38 = arith.constant 1 : i32
    %61 = tpu.dynamic_rotate %56 by %c1_i32_38 dim 0 : vector<64x128xf32>, i32 -> vector<64x128xf32>
    %cst_39 = arith.constant 0.000000e+00 : f32
    %62 = vector.broadcast %cst_39 : f32 to vector<64x128xf32>
    %63 = arith.select %4, %62, %61 : vector<64x128xi1>, vector<64x128xf32>
    %c63_i32_40 = arith.constant 63 : i32
    %64 = tpu.dynamic_rotate %56 by %c63_i32_40 dim 0 : vector<64x128xf32>, i32 -> vector<64x128xf32>
    %cst_41 = arith.constant 0.000000e+00 : f32
    %65 = vector.broadcast %cst_41 : f32 to vector<64x128xf32>
    %66 = arith.select %6, %65, %64 : vector<64x128xi1>, vector<64x128xf32>
    %67 = tpu.concatenate %63, %56, %66 in 1 : vector<64x128xf32>, vector<64x128xf32>, vector<64x128xf32> -> vector<64x384xf32>
    %68 = arith.truncf %67 : vector<64x384xf32> to vector<64x384xbf16>
    %cst_42 = arith.constant dense<0.000000e+00> : vector<64x128xf32>
    %69 = tpu.matmul %68, %58, %cst_42 {dimension_numbers = #tpu.dot_dimension_numbers<[1], [0], [0], [1], [0, 0, 1, 1], [], []>} : vector<64x384xbf16>, vector<384x128xbf16>, vector<64x128xf32> -> vector<64x128xf32>
    %70 = vector.broadcast %60 : vector<1x128xf32> to vector<64x128xf32>
    %71 = arith.addf %69, %70 : vector<64x128xf32>
    %72 = arith.addf %39, %71 : vector<64x128xf32>
    %c0_43 = arith.constant 0 : index
    %c0_44 = arith.constant 0 : index
    %73 = vector.load %arg6[%c0_43, %c0_44] : memref<64x128xf32, #tpu.memory_space<vmem>>, vector<64x128xf32>
    tpu.vector_store %arg6[%c0_43, %c0_44], %72 {strides = array<i32>} : memref<64x128xf32, #tpu.memory_space<vmem>>, vector<64x128xf32>,
    return
  }
  func.func @transform_0(%arg0: i32) -> (i32, i32) {
    %c0_i32 = arith.constant 0 : i32
    %c0_i32_0 = arith.constant 0 : i32
    return %arg0, %c0_i32 : i32, i32
  }
  func.func @transform_1(%arg0: i32) -> (i32, i32, i32) {
    %c0_i32 = arith.constant 0 : i32
    %c0_i32_0 = arith.constant 0 : i32
    %c0_i32_1 = arith.constant 0 : i32
    %c0_i32_2 = arith.constant 0 : i32
    return %c0_i32, %c0_i32_0, %c0_i32_1 : i32, i32, i32
  }
  func.func @transform_2(%arg0: i32) -> (i32, i32, i32) {
    %c0_i32 = arith.constant 0 : i32
    %c0_i32_0 = arith.constant 0 : i32
    %c0_i32_1 = arith.constant 0 : i32
    %c0_i32_2 = arith.constant 0 : i32
    return %c0_i32, %c0_i32_0, %c0_i32_1 : i32, i32, i32
  }
  func.func @transform_3(%arg0: i32) -> (i32, i32, i32) {
    %c0_i32 = arith.constant 0 : i32
    %c0_i32_0 = arith.constant 0 : i32
    %c0_i32_1 = arith.constant 0 : i32
    %c0_i32_2 = arith.constant 0 : i32
    return %c0_i32, %c0_i32_0, %c0_i32_1 : i32, i32, i32
  }
  func.func @transform_4(%arg0: i32) -> (i32, i32, i32) {
    %c0_i32 = arith.constant 0 : i32
    %c0_i32_0 = arith.constant 0 : i32
    %c0_i32_1 = arith.constant 0 : i32
    %c0_i32_2 = arith.constant 0 : i32
    return %c0_i32, %c0_i32_0, %c0_i32_1 : i32, i32, i32
  }
  func.func @transform_5(%arg0: i32) -> (i32, i32) {
    %c0_i32 = arith.constant 0 : i32
    %c0_i32_0 = arith.constant 0 : i32
    return %arg0, %c0_i32 : i32, i32
  }
}

</mosaic_0001>

<llo_original>
// kernel: projnet_m_forward.1
$region0: #{projnet_m_forward.1}
  #allocation0 [shape = 'u32[]', space=smem, size = 0x4, offset = 0x4, fixed_abs, tag = 'smem constant byte address 0x4 - core index']
  #allocation1 [shape = 'u32[144,128]{1,0:T(1,128)}', space=vmem, size = 0x12000, scoped, tag = 'internal scratch']
  %s0 = inlined_call_operand.vmem [shape: f32[128,128], index: 0, kind: input, shape index: {}, may-alias: {0,5}]
  %s1 = inlined_call_operand.vmem [shape: bf16[2,384,128], index: 1, kind: input, shape index: {}]
  %s2 = inlined_call_operand.vmem [shape: f32[2,1,128], index: 2, kind: input, shape index: {}]
  %s3 = inlined_call_operand.vmem [shape: bf16[2,384,128], index: 3, kind: input, shape index: {}]
  %s4 = inlined_call_operand.vmem [shape: f32[2,1,128], index: 4, kind: input, shape index: {}]
  %s5 = inlined_call_operand.vmem [shape: f32[128,128], index: 5, kind: output, shape index: {}, may-alias: {0,5}]
  %s6 = sld [smem:[#allocation0]]
  $region53: #{projnet_m_forward.1} parent=0
    _
  %s8 = ssub.s32 1, %s6
  %s9 = scalar_select 0, %s8, %s6
  loop: start=0, step=1, limit=4
  $region2: #{projnet_m_forward.1} parent=0 // loop_pre_header
    _
  $region3: #{projnet_m_forward.1} parent=0 // loop_header
    %s11 = sphi 0, %s15
    %p12 = scmp.ge.s32.totalorder %s11, 4
    %s21 = sphi 0, %s23
    %s24 = sphi 0, %s21
    %s25 = sphi 0, %s24
    %s41 = sphi 0, %s25
    %s45 = sphi 0, %s45
    %s47 = sphi 0, %s45
    %s48 = sphi 0, %s47
    %s62 = sphi 0, %s48
    %s66 = sphi 0, %s66
    %s68 = sphi 0, %s66
    %s69 = sphi 0, %s68
    %s83 = sphi 0, %s69
    %s87 = sphi 0, %s87
    %s89 = sphi 0, %s87
    %s90 = sphi 0, %s89
    %s104 = sphi 0, %s90
    %s108 = sphi 0, %s108
    %s110 = sphi 0, %s108
    %s111 = sphi 0, %s110
    %s125 = sphi 0, %s111
    %s131 = sphi 0, %s133
    %s134 = sphi 0, %s131
    %s135 = sphi 0, %s134
    %s151 = sphi 0, %s135
  $region4: #{projnet_m_forward.1} parent=0 // loop_header_branch
    %14 = sbr.rel (%p12) target = $region8
  $region5: #{projnet_m_forward.1} parent=0 // loop_body
    %s16 = ssub.s32 %s11, 1
    %s17 = ssub.s32 %s11, 2
    %s18 = sadd.s32 %s11, 1
    %s19 = ssub.s32 %s11, %s18
    %p20 = scmp.eq.s32.totalorder %s19, 0
    %s22 = sadd.s32 %s21, 1
    %s23 = scalar_select %p20, %s21, %s22
    %p26 = pneg %p20
    %p27 = scmp.eq.s32.totalorder %s11, 1
    %p28 = por %p26, %p27
    %p29 = scmp.ne.s32.totalorder %s21, %s24
    %p30 = scmp.eq.s32.totalorder %s11, 0
    %p31 = por %p29, %p30
    %p32 = scmp.ne.s32.totalorder %s21, %s24
    %p33 = scmp.eq.s32.totalorder %s16, 1
    %p34 = por %p32, %p33
    %p35 = scmp.ne.s32.totalorder %s24, %s25
    %p36 = scmp.eq.s32.totalorder %s16, 0
    %p37 = por %p35, %p36
    %p38 = scmp.ne.s32.totalorder %s24, %s25
    %p39 = scmp.eq.s32.totalorder %s17, 1
    %p40 = por %p38, %p39
    %p42 = scmp.ne.s32.totalorder %s25, %s41
    %p43 = scmp.eq.s32.totalorder %s17, 0
    %p44 = por %p42, %p43
    %s46 = sadd.s32 %s45, 1
    %p49 = scmp.eq.s32.totalorder %s11, 1
    %p50 = scmp.ne.s32.totalorder %s45, %s47
    %p51 = scmp.eq.s32.totalorder %s11, 0
    %p52 = por %p50, %p51
    %p53 = scmp.ne.s32.totalorder %s45, %s47
    %p54 = scmp.eq.s32.totalorder %s16, 1
    %p55 = por %p53, %p54
    %p56 = scmp.ne.s32.totalorder %s47, %s48
    %p57 = scmp.eq.s32.totalorder %s16, 0
    %p58 = por %p56, %p57
    %p59 = scmp.ne.s32.totalorder %s47, %s48
    %p60 = scmp.eq.s32.totalorder %s17, 1
    %p61 = por %p59, %p60
    %p63 = scmp.ne.s32.totalorder %s48, %s62
    %p64 = scmp.eq.s32.totalorder %s17, 0
    %p65 = por %p63, %p64
    %s67 = sadd.s32 %s66, 1
    %p70 = scmp.eq.s32.totalorder %s11, 1
    %p71 = scmp.ne.s32.totalorder %s66, %s68
    %p72 = scmp.eq.s32.totalorder %s11, 0
    %p73 = por %p71, %p72
    %p74 = scmp.ne.s32.totalorder %s66, %s68
    %p75 = scmp.eq.s32.totalorder %s16, 1
    %p76 = por %p74, %p75
    %p77 = scmp.ne.s32.totalorder %s68, %s69
    %p78 = scmp.eq.s32.totalorder %s16, 0
    %p79 = por %p77, %p78
    %p80 = scmp.ne.s32.totalorder %s68, %s69
    %p81 = scmp.eq.s32.totalorder %s17, 1
    %p82 = por %p80, %p81
    %p84 = scmp.ne.s32.totalorder %s69, %s83
    %p85 = scmp.eq.s32.totalorder %s17, 0
    %p86 = por %p84, %p85
    %s88 = sadd.s32 %s87, 1
    %p91 = scmp.eq.s32.totalorder %s11, 1
    %p92 = scmp.ne.s32.totalorder %s87, %s89
    %p93 = scmp.eq.s32.totalorder %s11, 0
    %p94 = por %p92, %p93
    %p95 = scmp.ne.s32.totalorder %s87, %s89
    %p96 = scmp.eq.s32.totalorder %s16, 1
    %p97 = por %p95, %p96
    %p98 = scmp.ne.s32.totalorder %s89, %s90
    %p99 = scmp.eq.s32.totalorder %s16, 0
    %p100 = por %p98, %p99
    %p101 = scmp.ne.s32.totalorder %s89, %s90
    %p102 = scmp.eq.s32.totalorder %s17, 1
    %p103 = por %p101, %p102
    %p105 = scmp.ne.s32.totalorder %s90, %s104
    %p106 = scmp.eq.s32.totalorder %s17, 0
    %p107 = por %p105, %p106
    %s109 = sadd.s32 %s108, 1
    %p112 = scmp.eq.s32.totalorder %s11, 1
    %p113 = scmp.ne.s32.totalorder %s108, %s110
    %p114 = scmp.eq.s32.totalorder %s11, 0
    %p115 = por %p113, %p114
    %p116 = scmp.ne.s32.totalorder %s108, %s110
    %p117 = scmp.eq.s32.totalorder %s16, 1
    %p118 = por %p116, %p117
    %p119 = scmp.ne.s32.totalorder %s110, %s111
    %p120 = scmp.eq.s32.totalorder %s16, 0
    %p121 = por %p119, %p120
    %p122 = scmp.ne.s32.totalorder %s110, %s111
    %p123 = scmp.eq.s32.totalorder %s17, 1
    %p124 = por %p122, %p123
    %p126 = scmp.ne.s32.totalorder %s111, %s125
    %p127 = scmp.eq.s32.totalorder %s17, 0
    %p128 = por %p126, %p127
    %s129 = ssub.s32 %s11, %s18
    %p130 = scmp.eq.s32.totalorder %s129, 0
    %s132 = sadd.s32 %s131, 1
    %s133 = scalar_select %p130, %s131, %s132
    %p136 = pneg %p130
    %p137 = scmp.eq.s32.totalorder %s11, 1
    %p138 = por %p136, %p137
    %p139 = scmp.ne.s32.totalorder %s131, %s134
    %p140 = scmp.eq.s32.totalorder %s11, 0
    %p141 = por %p139, %p140
    %p142 = scmp.ne.s32.totalorder %s131, %s134
    %p143 = scmp.eq.s32.totalorder %s16, 1
    %p144 = por %p142, %p143
    %p145 = scmp.ne.s32.totalorder %s134, %s135
    %p146 = scmp.eq.s32.totalorder %s16, 0
    %p147 = por %p145, %p146
    %p148 = scmp.ne.s32.totalorder %s134, %s135
    %p149 = scmp.eq.s32.totalorder %s17, 1
    %p150 = por %p148, %p149
    %p152 = scmp.ne.s32.totalorder %s135, %s151
    %p153 = scmp.eq.s32.totalorder %s17, 0
    %p154 = por %p152, %p153
    %p155 = scmp.le.s32.totalorder 1, %s11
    %p156 = scmp.lt.s32.totalorder %s11, 3
    %p157 = pnand %p155, %p156
    %p158 = pneg %p157
    // Predicated region
    $region9: #{projnet_m_forward.1} parent=5 // pred_check
      _
    $region10: #{projnet_m_forward.1} parent=5 // pred_check_branch
      %160 = sbr.rel (%p157) target = $region12
    $region11: #{projnet_m_forward.1} parent=5 // pred_region
      %s161 = ssub.s32 %s11, 1
      // Predicated region
      $region13: #{projnet_m_forward.1} parent=11 // pred_check
        %p162 = pneg %p58
      $region14: #{projnet_m_forward.1} parent=11 // pred_check_branch
        %164 = sbr.rel (%p162) target = $region16
      $region15: #{projnet_m_forward.1} parent=11 // pred_region
        _
      $region16: #{projnet_m_forward.1} parent=11 // pred_fallthru
        _
      // Predicated region
      $region17: #{projnet_m_forward.1} parent=11 // pred_check
        %p165 = pneg %p79
      $region18: #{projnet_m_forward.1} parent=11 // pred_check_branch
        %167 = sbr.rel (%p165) target = $region20
      $region19: #{projnet_m_forward.1} parent=11 // pred_region
        _
      $region20: #{projnet_m_forward.1} parent=11 // pred_fallthru
        _
      // Predicated region
      $region21: #{projnet_m_forward.1} parent=11 // pred_check
        %p168 = pneg %p100
      $region22: #{projnet_m_forward.1} parent=11 // pred_check_branch
        %170 = sbr.rel (%p168) target = $region24
      $region23: #{projnet_m_forward.1} parent=11 // pred_region
        _
      $region24: #{projnet_m_forward.1} parent=11 // pred_fallthru
        _
      // Predicated region
      $region25: #{projnet_m_forward.1} parent=11 // pred_check
        %p171 = pneg %p121
      $region26: #{projnet_m_forward.1} parent=11 // pred_check_branch
        %173 = sbr.rel (%p171) target = $region28
      $region27: #{projnet_m_forward.1} parent=11 // pred_region
        _
      $region28: #{projnet_m_forward.1} parent=11 // pred_fallthru
        _
    $region12: #{projnet_m_forward.1} parent=5 // pred_fallthru
      _
    %p174 = scmp.lt.s32.totalorder %s11, 2
    // Predicated region
    $region29: #{projnet_m_forward.1} parent=5 // pred_check
      %p175 = pneg %p174
    $region30: #{projnet_m_forward.1} parent=5 // pred_check_branch
      %177 = sbr.rel (%p175) target = $region32
    $region31: #{projnet_m_forward.1} parent=5 // pred_region
      // Predicated region
      $region33: #{projnet_m_forward.1} parent=31 // pred_check
        %p178 = pneg %p31
      $region34: #{projnet_m_forward.1} parent=31 // pred_check_branch
        %180 = sbr.rel (%p178) target = $region36
      $region35: #{projnet_m_forward.1} parent=31 // pred_region
        %s181 = smul.u32 8, %s11
        %p182 = scmp.lt.s32.totalorder %s181, 15
        %s183 = scalar_select %p182, %s181, 15
        %s184 = smul.addr %s183, 8
        %s185 = scalar_lea.vmem %s0, %s184
        %s186 = smul.u32 8, %s11
      $region36: #{projnet_m_forward.1} parent=31 // pred_fallthru
        _
    $region32: #{projnet_m_forward.1} parent=5 // pred_fallthru
      _
    %p187 = scmp.le.s32.totalorder 1, %s11
    %p188 = scmp.lt.s32.totalorder %s11, 3
    %p189 = pnand %p187, %p188
    %p190 = pneg %p189
    // Predicated region
    $region37: #{projnet_m_forward.1} parent=5 // pred_check
      _
    $region38: #{projnet_m_forward.1} parent=5 // pred_check_branch
      %192 = sbr.rel (%p189) target = $region40
    $region39: #{projnet_m_forward.1} parent=5 // pred_region
      %s193 = ssub.s32 %s11, 1
      %s194 = smul.u32 8, %s16
      %p195 = scmp.lt.s32.totalorder %s194, 15
      %s196 = scalar_select %p195, %s194, 15
      %s197 = smul.addr %s196, 8
      %s198 = scalar_lea.vmem %s0, %s197
      %p199 = pneg %p37
      %p200 = pneg %p34
      %p201 = pneg %p58
      %p202 = pneg %p55
      %p203 = pneg %p79
      %p204 = pneg %p76
      %p205 = pneg %p100
      %p206 = pneg %p97
      %p207 = pneg %p121
      %p208 = pneg %p118
      %p209 = pneg %p147
      %p210 = pneg %p144
      %s211 = smul.u32 8, %s16
      %p212 = scmp.lt.s32.totalorder %s211, 15
      %s213 = scalar_select %p212, %s211, 15
      %s214 = smul.addr %s213, 8
      %s215 = scalar_lea.vmem %s5, %s214
      %s216 = smul.u32 8, %s16
      %p217 = scmp.lt.s32.totalorder %s216, 15
      %s218 = scalar_select %p217, %s216, 15
      %s219 = smul.addr %s218, 8
      %s220 = scalar_lea.vmem %s0, %s219
      %s221 = smul.u32 8, %s16
      %s222 = smul.u32 8, %s16
      %p223 = scmp.lt.s32.totalorder %s222, 15
      %s224 = scalar_select %p223, %s222, 15
      %s225 = smul.addr %s224, 8
      %s226 = scalar_lea.vmem %s5, %s225
      %s227 = smul.u32 8, %s16
      %v229 = vld [vmem:[%s220] sm:$0xff]
      %v230 = vld [vmem:[%s220 + $0x8] sm:$0xff]
      %v231 = vld [vmem:[%s220 + $0x10] sm:$0xff]
      %v232 = vld [vmem:[%s220 + $0x18] sm:$0xff]
      %v233 = vld [vmem:[%s220 + $0x20] sm:$0xff]
      %v234 = vld [vmem:[%s220 + $0x28] sm:$0xff]
      %v235 = vld [vmem:[%s220 + $0x30] sm:$0xff]
      %v236 = vld [vmem:[%s220 + $0x38] sm:$0xff]
      %v237 = vlaneseq
      %v238 = vshrl.u32 %v237, 7
      %v239 = vadd.s32 %v238, 8
      %vm240 = vcmp.eq.s32.totalorder %v238, 0
      %vm241 = vcmp.eq.s32.totalorder %v239, 0
      %vm242 = vcmp.eq.s32.totalorder %v238, 15
      %vm243 = vcmp.eq.s32.totalorder %v239, 15
      %v244 = vld [vmem:[%s1] sm:$0xf]
      %v245 = vld [vmem:[%s1 + $0x4] sm:$0xf]
      %v246 = vld [vmem:[%s1 + $0x8] sm:$0xf]
      %v247 = vld [vmem:[%s1 + $0xc] sm:$0xf]
      %v248 = vld [vmem:[%s1 + $0x10] sm:$0xf]
      %v249 = vld [vmem:[%s1 + $0x14] sm:$0xf]
      %v250 = vld [vmem:[%s1 + $0x18] sm:$0xf]
      %v251 = vld [vmem:[%s1 + $0x1c] sm:$0xf]
      %v252 = vld [vmem:[%s1 + $0x20] sm:$0xf]
      %v253 = vld [vmem:[%s1 + $0x24] sm:$0xf]
      %v254 = vld [vmem:[%s1 + $0x28] sm:$0xf]
      %v255 = vld [vmem:[%s1 + $0x2c] sm:$0xf]
      %v256 = vld [vmem:[%s1 + $0x30] sm:$0xf]
      %v257 = vld [vmem:[%s1 + $0x34] sm:$0xf]
      %v258 = vld [vmem:[%s1 + $0x38] sm:$0xf]
      %v259 = vld [vmem:[%s1 + $0x3c] sm:$0xf]
      %v260 = vld [vmem:[%s1 + $0x40] sm:$0xf]
      %v261 = vld [vmem:[%s1 + $0x44] sm:$0xf]
      %v262 = vld [vmem:[%s1 + $0x48] sm:$0xf]
      %v263 = vld [vmem:[%s1 + $0x4c] sm:$0xf]
      %v264 = vld [vmem:[%s1 + $0x50] sm:$0xf]
      %v265 = vld [vmem:[%s1 + $0x54] sm:$0xf]
      %v266 = vld [vmem:[%s1 + $0x58] sm:$0xf]
      %v267 = vld [vmem:[%s1 + $0x5c] sm:$0xf]
      %v268 = vld [vmem:[%s1 + $0x60] sm:$0xf]
      %v269 = vld [vmem:[%s1 + $0x64] sm:$0xf]
      %v270 = vld [vmem:[%s1 + $0x68] sm:$0xf]
      %v271 = vld [vmem:[%s1 + $0x6c] sm:$0xf]
      %v272 = vld [vmem:[%s1 + $0x70] sm:$0xf]
      %v273 = vld [vmem:[%s1 + $0x74] sm:$0xf]
      %v274 = vld [vmem:[%s1 + $0x78] sm:$0xf]
      %v275 = vld [vmem:[%s1 + $0x7c] sm:$0xf]
      %v276 = vld [vmem:[%s1 + $0x80] sm:$0xf]
      %v277 = vld [vmem:[%s1 + $0x84] sm:$0xf]
      %v278 = vld [vmem:[%s1 + $0x88] sm:$0xf]
      %v279 = vld [vmem:[%s1 + $0x8c] sm:$0xf]
      %v280 = vld [vmem:[%s1 + $0x90] sm:$0xf]
      %v281 = vld [vmem:[%s1 + $0x94] sm:$0xf]
      %v282 = vld [vmem:[%s1 + $0x98] sm:$0xf]
      %v283 = vld [vmem:[%s1 + $0x9c] sm:$0xf]
      %v284 = vld [vmem:[%s1 + $0xa0] sm:$0xf]
      %v285 = vld [vmem:[%s1 + $0xa4] sm:$0xf]
      %v286 = vld [vmem:[%s1 + $0xa8] sm:$0xf]
      %v287 = vld [vmem:[%s1 + $0xac] sm:$0xf]
      %v288 = vld [vmem:[%s1 + $0xb0] sm:$0xf]
      %v289 = vld [vmem:[%s1 + $0xb4] sm:$0xf]
      %v290 = vld [vmem:[%s1 + $0xb8] sm:$0xf]
      %v291 = vld [vmem:[%s1 + $0xbc] sm:$0xf]
      %v292 = vld [vmem:[%s2] sm:$0x1]
      %v293 = vrot.slane %v229, 7
      %v294 = vrot.slane %v230, 7
      %v295 = vrot.slane %v231, 7
      %v296 = vrot.slane %v232, 7
      %v297 = vrot.slane %v233, 7
      %v298 = vrot.slane %v234, 7
      %v299 = vrot.slane %v235, 7
      %v300 = vrot.slane %v236, 7
      %vm301 = vcmp.lt.s32.totalorder %v238, 1
      %v302 = vsel %vm301, %v299, %v300
      %v303 = vsel %vm301, %v298, %v299
      %v304 = vsel %vm301, %v297, %v298
      %v305 = vsel %vm301, %v296, %v297
      %v306 = vsel %vm301, %v295, %v296
      %v307 = vsel %vm301, %v294, %v295
      %v308 = vsel %vm301, %v293, %v294
      %v309 = vsel %vm301, %v300, %v293
      %v310 = vsel %vm240, 0.0, %v309
      %v311 = vsel %vm241, 0.0, %v308
      %v312 = vsel %vm240, 0.0, %v307
      %v313 = vsel %vm241, 0.0, %v306
      %v314 = vsel %vm240, 0.0, %v305
      %v315 = vsel %vm241, 0.0, %v304
      %v316 = vsel %vm240, 0.0, %v303
      %v317 = vsel %vm241, 0.0, %v302
      %v318 = vrot.slane %v229, 1
      %v319 = vrot.slane %v230, 1
      %v320 = vrot.slane %v231, 1
      %v321 = vrot.slane %v232, 1
      %v322 = vrot.slane %v233, 1
      %v323 = vrot.slane %v234, 1
      %v324 = vrot.slane %v235, 1
      %v325 = vrot.slane %v236, 1
      %vm326 = vcmp.lt.s32.totalorder %v238, 7
      %v327 = vsel %vm326, %v324, %v325
      %v328 = vsel %vm326, %v323, %v324
      %v329 = vsel %vm326, %v322, %v323
      %v330 = vsel %vm326, %v321, %v322
      %v331 = vsel %vm326, %v320, %v321
      %v332 = vsel %vm326, %v319, %v320
      %v333 = vsel %vm326, %v318, %v319
      %v334 = vsel %vm326, %v325, %v318
      %v335 = vsel %vm242, 0.0, %v333
      %v336 = vsel %vm243, 0.0, %v332
      %v337 = vsel %vm242, 0.0, %v331
      %v338 = vsel %vm243, 0.0, %v330
      %v339 = vsel %vm242, 0.0, %v329
      %v340 = vsel %vm243, 0.0, %v328
      %v341 = vsel %vm242, 0.0, %v327
      %v342 = vsel %vm243, 0.0, %v334
      %v343 = vpack.c.bf16 %v311, %v310
      %v344 = vpack.c.bf16 %v230, %v229
      %v345 = vpack.c.bf16 %v336, %v335
      %v346 = vpack.c.bf16 %v313, %v312
      %v347 = vpack.c.bf16 %v232, %v231
      %v348 = vpack.c.bf16 %v338, %v337
      %v349 = vpack.c.bf16 %v315, %v314
      %v350 = vpack.c.bf16 %v234, %v233
      %v351 = vpack.c.bf16 %v340, %v339
      %v352 = vpack.c.bf16 %v317, %v316
      %v353 = vpack.c.bf16 %v236, %v235
      %v354 = vpack.c.bf16 %v342, %v341
      %v356 = vlaneseq
      %v357 = vshrl.u32 %v356, 7
      %v358 = vsub.s32 0, %v357
      %v359 = vrot.slane %v292, %v358
      %v409 = vunpack.c.l.b16 %v244
      %v410 = vunpack.c.l.b16 %v245
      %v411 = vunpack.c.l.b16 %v246
      %v412 = vunpack.c.l.b16 %v247
      %v413 = vunpack.c.l.b16 %v248
      %v414 = vunpack.c.l.b16 %v249
      %v415 = vunpack.c.l.b16 %v250
      %v416 = vunpack.c.l.b16 %v251
      %v417 = vunpack.c.l.b16 %v252
      %v418 = vunpack.c.l.b16 %v253
      %v419 = vunpack.c.l.b16 %v254
      %v420 = vunpack.c.l.b16 %v255
      %v421 = vunpack.c.l.b16 %v256
      %v422 = vunpack.c.l.b16 %v257
      %v423 = vunpack.c.l.b16 %v258
      %v424 = vunpack.c.l.b16 %v259
      %v425 = vunpack.c.l.b16 %v260
      %v426 = vunpack.c.l.b16 %v261
      %v427 = vunpack.c.l.b16 %v262
      %v428 = vunpack.c.l.b16 %v263
      %v429 = vunpack.c.l.b16 %v264
      %v430 = vunpack.c.l.b16 %v265
      %v431 = vunpack.c.l.b16 %v266
      %v432 = vunpack.c.l.b16 %v267
      %v433 = vunpack.c.l.b16 %v268
      %v434 = vunpack.c.l.b16 %v269
      %v435 = vunpack.c.l.b16 %v270
      %v436 = vunpack.c.l.b16 %v271
      %v437 = vunpack.c.l.b16 %v272
      %v438 = vunpack.c.l.b16 %v273
      %v439 = vunpack.c.l.b16 %v274
      %v440 = vunpack.c.l.b16 %v275
      %v441 = vunpack.c.l.b16 %v276
      %v442 = vunpack.c.l.b16 %v277
      %v443 = vunpack.c.l.b16 %v278
      %v444 = vunpack.c.l.b16 %v279
      %v445 = vunpack.c.l.b16 %v280
      %v446 = vunpack.c.l.b16 %v281
      %v447 = vunpack.c.l.b16 %v282
      %v448 = vunpack.c.l.b16 %v283
      %v449 = vunpack.c.l.b16 %v284
      %v450 = vunpack.c.l.b16 %v285
      %v451 = vunpack.c.l.b16 %v286
      %v452 = vunpack.c.l.b16 %v287
      %v453 = vunpack.c.l.b16 %v288
      %v454 = vunpack.c.l.b16 %v289
      %v455 = vunpack.c.l.b16 %v290
      %v456 = vunpack.c.l.b16 %v291
      %v457 = vpack.c.b16 %v410, %v409
      %v458 = vpack.c.b16 %v412, %v411
      %v459 = vpack.c.b16 %v414, %v413
      %v460 = vpack.c.b16 %v416, %v415
      %v461 = vpack.c.b16 %v418, %v417
      %v462 = vpack.c.b16 %v420, %v419
      %v463 = vpack.c.b16 %v422, %v421
      %v464 = vpack.c.b16 %v424, %v423
      %v465 = vpack.c.b16 %v426, %v425
      %v466 = vpack.c.b16 %v428, %v427
      %v467 = vpack.c.b16 %v430, %v429
      %v468 = vpack.c.b16 %v432, %v431
      %v469 = vpack.c.b16 %v434, %v433
      %v470 = vpack.c.b16 %v436, %v435
      %v471 = vpack.c.b16 %v438, %v437
      %v472 = vpack.c.b16 %v440, %v439
      %v473 = vpack.c.b16 %v442, %v441
      %v474 = vpack.c.b16 %v444, %v443
      %v475 = vpack.c.b16 %v446, %v445
      %v476 = vpack.c.b16 %v448, %v447
      %v477 = vpack.c.b16 %v450, %v449
      %v478 = vpack.c.b16 %v452, %v451
      %v479 = vpack.c.b16 %v454, %v453
      %v480 = vpack.c.b16 %v456, %v455
      %505 = vmatprep.subr.bf16.mxu0 0
      %506 = vmatpush1.bf16.msra.mxu0 %v457
      %507 = vmatprep.subr.bf16.mxu0 0
      %508 = vmatpush1.bf16.msra.mxu0 %v458
      %509 = vmatprep.subr.bf16.mxu0 0
      %510 = vmatpush1.bf16.msra.mxu0 %v459
      %511 = vmatprep.subr.bf16.mxu0 0
      %512 = vmatpush1.bf16.msra.mxu0 %v460
      %513 = vmatprep.subr.bf16.mxu0 0
      %514 = vmatpush1.bf16.msra.mxu0 %v461
      %515 = vmatprep.subr.bf16.mxu0 0
      %516 = vmatpush1.bf16.msra.mxu0 %v462
      %517 = vmatprep.subr.bf16.mxu0 0
      %518 = vmatpush1.bf16.msra.mxu0 %v463
      %519 = vmatprep.subr.bf16.mxu0 0
      %520 = vmatpush1.bf16.msra.mxu0 %v464
      %521 = vmatprep.subr.bf16.mxu0 0
      %522 = vmatpush1.bf16.msra.mxu0 %v465
      %523 = vmatprep.subr.bf16.mxu0 0
      %524 = vmatpush1.bf16.msra.mxu0 %v466
      %525 = vmatprep.subr.bf16.mxu0 0
      %526 = vmatpush1.bf16.msra.mxu0 %v467
      %527 = vmatprep.subr.bf16.mxu0 0
      %528 = vmatpush1.bf16.msra.mxu0 %v468
      %529 = vmatprep.subr.bf16.mxu0 0
      %530 = vmatpush1.bf16.msra.mxu0 %v469
      %531 = vmatprep.subr.bf16.mxu0 0
      %532 = vmatpush1.bf16.msra.mxu0 %v470
      %533 = vmatprep.subr.bf16.mxu0 0
      %534 = vmatpush1.bf16.msra.mxu0 %v471
      %535 = vmatprep.subr.bf16.mxu0 0
      %536 = vmatpush1.bf16.msra.mxu0 %v472
      %537 = vmatprep.mubr.bf16.mxu0 %v344
      %538 = vmatmul.mubr.bf16.gmra.mrb[0].mxu0 %v343
      %v539 = vpop.f32.mrb[0].mxu0
      %v540 = vadd.f32 %v359, %v539
      %v541 = vpop.f32.mrb[0].mxu0
      %v542 = vpop.f32.mrb[0].mxu0
      %v543 = vadd.f32 %v359, %v542
      %v544 = vpop.f32.mrb[0].mxu0
      %545 = vmatprep.mubr.bf16.mxu0 %v347
      %546 = vmatmul.mubr.bf16.gmra.mrb[0].mxu0 %v346
      %v547 = vpop.f32.mrb[0].mxu0
      %v548 = vadd.f32 %v359, %v547
      %v549 = vpop.f32.mrb[0].mxu0
      %v550 = vpop.f32.mrb[0].mxu0
      %v551 = vadd.f32 %v359, %v550
      %v552 = vpop.f32.mrb[0].mxu0
      %553 = vmatprep.mubr.bf16.mxu0 %v350
      %554 = vmatmul.mubr.bf16.gmra.mrb[0].mxu0 %v349
      %v555 = vpop.f32.mrb[0].mxu0
      %v556 = vadd.f32 %v359, %v555
      %v557 = vpop.f32.mrb[0].mxu0
      %v558 = vpop.f32.mrb[0].mxu0
      %v559 = vadd.f32 %v359, %v558
      %v560 = vpop.f32.mrb[0].mxu0
      %561 = vmatprep.mubr.bf16.mxu0 %v353
      %562 = vmatmul.mubr.bf16.gmra.mrb[0].mxu0 %v352
      %v563 = vpop.f32.mrb[0].mxu0
      %v564 = vadd.f32 %v359, %v563
      %v565 = vpop.f32.mrb[0].mxu0
      %v566 = vpop.f32.mrb[0].mxu0
      %v567 = vadd.f32 %v359, %v566
      %v568 = vpop.f32.mrb[0].mxu0
      %569 = vdwg.mxu0
      %570 = vmatprep.subr.bf16.mxu0 0
      %571 = vmatpush1.bf16.msra.mxu0 %v473
      %572 = vmatprep.subr.bf16.mxu0 0
      %573 = vmatpush1.bf16.msra.mxu0 %v474
      %574 = vmatprep.subr.bf16.mxu0 0
      %575 = vmatpush1.bf16.msra.mxu0 %v475
      %576 = vmatprep.subr.bf16.mxu0 0
      %577 = vmatpush1.bf16.msra.mxu0 %v476
      %578 = vmatprep.subr.bf16.mxu0 0
      %579 = vmatpush1.bf16.msra.mxu0 %v477
      %580 = vmatprep.subr.bf16.mxu0 0
      %581 = vmatpush1.bf16.msra.mxu0 %v478
      %582 = vmatprep.subr.bf16.mxu0 0
      %583 = vmatpush1.bf16.msra.mxu0 %v479
      %584 = vmatprep.subr.bf16.mxu0 0
      %585 = vmatpush1.bf16.msra.mxu0 %v480
      %586 = vmatprep.subr.bf16.mxu0 0
      %587 = vmatpush1.bf16.msra.mxu0 0
      %588 = vmatprep.subr.bf16.mxu0 0
      %589 = vmatpush1.bf16.msra.mxu0 0
      %590 = vmatprep.subr.bf16.mxu0 0
      %591 = vmatpush1.bf16.msra.mxu0 0
      %592 = vmatprep.subr.bf16.mxu0 0
      %593 = vmatpush1.bf16.msra.mxu0 0
      %594 = vmatprep.subr.bf16.mxu0 0
      %595 = vmatpush1.bf16.msra.mxu0 0
      %596 = vmatprep.subr.bf16.mxu0 0
      %597 = vmatpush1.bf16.msra.mxu0 0
      %598 = vmatprep.subr.bf16.mxu0 0
      %599 = vmatpush1.bf16.msra.mxu0 0
      %600 = vmatprep.subr.bf16.mxu0 0
      %601 = vmatpush1.bf16.msra.mxu0 0
      %602 = vmatprep.mubr.bf16.mxu0 0
      %603 = vmatmul.mubr.bf16.gmra.mrb[0].mxu0 %v345
      %v604 = vpop.f32.mrb[0].mxu0
      %v605 = vadd.f32 %v540, %v604
      %v606 = vpop.f32.mrb[0].mxu0
      %v607 = vpop.f32.mrb[0].mxu0
      %v608 = vadd.f32 %v543, %v607
      %v609 = vpop.f32.mrb[0].mxu0
      %610 = vmatprep.mubr.bf16.mxu0 0
      %611 = vmatmul.mubr.bf16.gmra.mrb[0].mxu0 %v348
      %v612 = vpop.f32.mrb[0].mxu0
      %v613 = vadd.f32 %v548, %v612
      %v614 = vpop.f32.mrb[0].mxu0
      %v615 = vpop.f32.mrb[0].mxu0
      %v616 = vadd.f32 %v551, %v615
      %v617 = vpop.f32.mrb[0].mxu0
      %618 = vmatprep.mubr.bf16.mxu0 0
      %619 = vmatmul.mubr.bf16.gmra.mrb[0].mxu0 %v351
      %v620 = vpop.f32.mrb[0].mxu0
      %v621 = vadd.f32 %v556, %v620
      %v622 = vpop.f32.mrb[0].mxu0
      %v623 = vpop.f32.mrb[0].mxu0
      %v624 = vadd.f32 %v559, %v623
      %v625 = vpop.f32.mrb[0].mxu0
      %626 = vmatprep.mubr.bf16.mxu0 0
      %627 = vmatmul.mubr.bf16.gmra.mrb[0].mxu0 %v354
      %v628 = vpop.f32.mrb[0].mxu0
      %v629 = vadd.f32 %v564, %v628
      %v630 = vpop.f32.mrb[0].mxu0
      %v631 = vpop.f32.mrb[0].mxu0
      %v632 = vadd.f32 %v567, %v631
      %v633 = vpop.f32.mrb[0].mxu0
      %634 = vdwg.mxu0
      %v635 = vmax.f32 %v605, 0.0
      %v636 = vmax.f32 %v608, 0.0
      %v637 = vmax.f32 %v613, 0.0
      %v638 = vmax.f32 %v616, 0.0
      %v639 = vmax.f32 %v621, 0.0
      %v640 = vmax.f32 %v624, 0.0
      %v641 = vmax.f32 %v629, 0.0
      %v642 = vmax.f32 %v632, 0.0
      %v643 = vld [vmem:[%s3] sm:$0xf]
      %v644 = vld [vmem:[%s3 + $0x4] sm:$0xf]
      %v645 = vld [vmem:[%s3 + $0x8] sm:$0xf]
      %v646 = vld [vmem:[%s3 + $0xc] sm:$0xf]
      %v647 = vld [vmem:[%s3 + $0x10] sm:$0xf]
      %v648 = vld [vmem:[%s3 + $0x14] sm:$0xf]
      %v649 = vld [vmem:[%s3 + $0x18] sm:$0xf]
      %v650 = vld [vmem:[%s3 + $0x1c] sm:$0xf]
      %v651 = vld [vmem:[%s3 + $0x20] sm:$0xf]
      %v652 = vld [vmem:[%s3 + $0x24] sm:$0xf]
      %v653 = vld [vmem:[%s3 + $0x28] sm:$0xf]
      %v654 = vld [vmem:[%s3 + $0x2c] sm:$0xf]
      %v655 = vld [vmem:[%s3 + $0x30] sm:$0xf]
      %v656 = vld [vmem:[%s3 + $0x34] sm:$0xf]
      %v657 = vld [vmem:[%s3 + $0x38] sm:$0xf]
      %v658 = vld [vmem:[%s3 + $0x3c] sm:$0xf]
      %v659 = vld [vmem:[%s3 + $0x40] sm:$0xf]
      %v660 = vld [vmem:[%s3 + $0x44] sm:$0xf]
      %v661 = vld [vmem:[%s3 + $0x48] sm:$0xf]
      %v662 = vld [vmem:[%s3 + $0x4c] sm:$0xf]
      %v663 = vld [vmem:[%s3 + $0x50] sm:$0xf]
      %v664 = vld [vmem:[%s3 + $0x54] sm:$0xf]
      %v665 = vld [vmem:[%s3 + $0x58] sm:$0xf]
      %v666 = vld [vmem:[%s3 + $0x5c] sm:$0xf]
      %v667 = vld [vmem:[%s3 + $0x60] sm:$0xf]
      %v668 = vld [vmem:[%s3 + $0x64] sm:$0xf]
      %v669 = vld [vmem:[%s3 + $0x68] sm:$0xf]
      %v670 = vld [vmem:[%s3 + $0x6c] sm:$0xf]
      %v671 = vld [vmem:[%s3 + $0x70] sm:$0xf]
      %v672 = vld [vmem:[%s3 + $0x74] sm:$0xf]
      %v673 = vld [vmem:[%s3 + $0x78] sm:$0xf]
      %v674 = vld [vmem:[%s3 + $0x7c] sm:$0xf]
      %v675 = vld [vmem:[%s3 + $0x80] sm:$0xf]
      %v676 = vld [vmem:[%s3 + $0x84] sm:$0xf]
      %v677 = vld [vmem:[%s3 + $0x88] sm:$0xf]
      %v678 = vld [vmem:[%s3 + $0x8c] sm:$0xf]
      %v679 = vld [vmem:[%s3 + $0x90] sm:$0xf]
      %v680 = vld [vmem:[%s3 + $0x94] sm:$0xf]
      %v681 = vld [vmem:[%s3 + $0x98] sm:$0xf]
      %v682 = vld [vmem:[%s3 + $0x9c] sm:$0xf]
      %v683 = vld [vmem:[%s3 + $0xa0] sm:$0xf]
      %v684 = vld [vmem:[%s3 + $0xa4] sm:$0xf]
      %v685 = vld [vmem:[%s3 + $0xa8] sm:$0xf]
      %v686 = vld [vmem:[%s3 + $0xac] sm:$0xf]
      %v687 = vld [vmem:[%s3 + $0xb0] sm:$0xf]
      %v688 = vld [vmem:[%s3 + $0xb4] sm:$0xf]
      %v689 = vld [vmem:[%s3 + $0xb8] sm:$0xf]
      %v690 = vld [vmem:[%s3 + $0xbc] sm:$0xf]
      %v691 = vld [vmem:[%s4] sm:$0x1]
      %v692 = vrot.slane %v635, 7
      %v693 = vrot.slane %v636, 7
      %v694 = vrot.slane %v637, 7
      %v695 = vrot.slane %v638, 7
      %v696 = vrot.slane %v639, 7
      %v697 = vrot.slane %v640, 7
      %v698 = vrot.slane %v641, 7
      %v699 = vrot.slane %v642, 7
      %v700 = vsel %vm301, %v698, %v699
      %v701 = vsel %vm301, %v697, %v698
      %v702 = vsel %vm301, %v696, %v697
      %v703 = vsel %vm301, %v695, %v696
      %v704 = vsel %vm301, %v694, %v695
      %v705 = vsel %vm301, %v693, %v694
      %v706 = vsel %vm301, %v692, %v693
      %v707 = vsel %vm301, %v699, %v692
      %v708 = vsel %vm240, 0.0, %v707
      %v709 = vsel %vm241, 0.0, %v706
      %v710 = vsel %vm240, 0.0, %v705
      %v711 = vsel %vm241, 0.0, %v704
      %v712 = vsel %vm240, 0.0, %v703
      %v713 = vsel %vm241, 0.0, %v702
      %v714 = vsel %vm240, 0.0, %v701
      %v715 = vsel %vm241, 0.0, %v700
      %v716 = vrot.slane %v635, 1
      %v717 = vrot.slane %v636, 1
      %v718 = vrot.slane %v637, 1
      %v719 = vrot.slane %v638, 1
      %v720 = vrot.slane %v639, 1
      %v721 = vrot.slane %v640, 1
      %v722 = vrot.slane %v641, 1
      %v723 = vrot.slane %v642, 1
      %v724 = vsel %vm326, %v722, %v723
      %v725 = vsel %vm326, %v721, %v722
      %v726 = vsel %vm326, %v720, %v721
      %v727 = vsel %vm326, %v719, %v720
      %v728 = vsel %vm326, %v718, %v719
      %v729 = vsel %vm326, %v717, %v718
      %v730 = vsel %vm326, %v716, %v717
      %v731 = vsel %vm326, %v723, %v716
      %v732 = vsel %vm242, 0.0, %v730
      %v733 = vsel %vm243, 0.0, %v729
      %v734 = vsel %vm242, 0.0, %v728
      %v735 = vsel %vm243, 0.0, %v727
      %v736 = vsel %vm242, 0.0, %v726
      %v737 = vsel %vm243, 0.0, %v725
      %v738 = vsel %vm242, 0.0, %v724
      %v739 = vsel %vm243, 0.0, %v731
      %v740 = vpack.c.bf16 %v709, %v708
      %v741 = vpack.c.bf16 %v636, %v635
      %v742 = vpack.c.bf16 %v733, %v732
      %v743 = vpack.c.bf16 %v711, %v710
      %v744 = vpack.c.bf16 %v638, %v637
      %v745 = vpack.c.bf16 %v735, %v734
      %v746 = vpack.c.bf16 %v713, %v712
      %v747 = vpack.c.bf16 %v640, %v639
      %v748 = vpack.c.bf16 %v737, %v736
      %v749 = vpack.c.bf16 %v715, %v714
      %v750 = vpack.c.bf16 %v642, %v641
      %v751 = vpack.c.bf16 %v739, %v738
      %v753 = vlaneseq
      %v754 = vshrl.u32 %v753, 7
      %v755 = vsub.s32 0, %v754
      %v756 = vrot.slane %v691, %v755
      %v806 = vunpack.c.l.b16 %v643
      %v807 = vunpack.c.l.b16 %v644
      %v808 = vunpack.c.l.b16 %v645
      %v809 = vunpack.c.l.b16 %v646
      %v810 = vunpack.c.l.b16 %v647
      %v811 = vunpack.c.l.b16 %v648
      %v812 = vunpack.c.l.b16 %v649
      %v813 = vunpack.c.l.b16 %v650
      %v814 = vunpack.c.l.b16 %v651
      %v815 = vunpack.c.l.b16 %v652
      %v816 = vunpack.c.l.b16 %v653
      %v817 = vunpack.c.l.b16 %v654
      %v818 = vunpack.c.l.b16 %v655
      %v819 = vunpack.c.l.b16 %v656
      %v820 = vunpack.c.l.b16 %v657
      %v821 = vunpack.c.l.b16 %v658
      %v822 = vunpack.c.l.b16 %v659
      %v823 = vunpack.c.l.b16 %v660
      %v824 = vunpack.c.l.b16 %v661
      %v825 = vunpack.c.l.b16 %v662
      %v826 = vunpack.c.l.b16 %v663
      %v827 = vunpack.c.l.b16 %v664
      %v828 = vunpack.c.l.b16 %v665
      %v829 = vunpack.c.l.b16 %v666
      %v830 = vunpack.c.l.b16 %v667
      %v831 = vunpack.c.l.b16 %v668
      %v832 = vunpack.c.l.b16 %v669
      %v833 = vunpack.c.l.b16 %v670
      %v834 = vunpack.c.l.b16 %v671
      %v835 = vunpack.c.l.b16 %v672
      %v836 = vunpack.c.l.b16 %v673
      %v837 = vunpack.c.l.b16 %v674
      %v838 = vunpack.c.l.b16 %v675
      %v839 = vunpack.c.l.b16 %v676
      %v840 = vunpack.c.l.b16 %v677
      %v841 = vunpack.c.l.b16 %v678
      %v842 = vunpack.c.l.b16 %v679
      %v843 = vunpack.c.l.b16 %v680
      %v844 = vunpack.c.l.b16 %v681
      %v845 = vunpack.c.l.b16 %v682
      %v846 = vunpack.c.l.b16 %v683
      %v847 = vunpack.c.l.b16 %v684
      %v848 = vunpack.c.l.b16 %v685
      %v849 = vunpack.c.l.b16 %v686
      %v850 = vunpack.c.l.b16 %v687
      %v851 = vunpack.c.l.b16 %v688
      %v852 = vunpack.c.l.b16 %v689
      %v853 = vunpack.c.l.b16 %v690
      %v854 = vpack.c.b16 %v807, %v806
      %v855 = vpack.c.b16 %v809, %v808
      %v856 = vpack.c.b16 %v811, %v810
      %v857 = vpack.c.b16 %v813, %v812
      %v858 = vpack.c.b16 %v815, %v814
      %v859 = vpack.c.b16 %v817, %v816
      %v860 = vpack.c.b16 %v819, %v818
      %v861 = vpack.c.b16 %v821, %v820
      %v862 = vpack.c.b16 %v823, %v822
      %v863 = vpack.c.b16 %v825, %v824
      %v864 = vpack.c.b16 %v827, %v826
      %v865 = vpack.c.b16 %v829, %v828
      %v866 = vpack.c.b16 %v831, %v830
      %v867 = vpack.c.b16 %v833, %v832
      %v868 = vpack.c.b16 %v835, %v834
      %v869 = vpack.c.b16 %v837, %v836
      %v870 = vpack.c.b16 %v839, %v838
      %v871 = vpack.c.b16 %v841, %v840
      %v872 = vpack.c.b16 %v843, %v842
      %v873 = vpack.c.b16 %v845, %v844
      %v874 = vpack.c.b16 %v847, %v846
      %v875 = vpack.c.b16 %v849, %v848
      %v876 = vpack.c.b16 %v851, %v850
      %v877 = vpack.c.b16 %v853, %v852
      %902 = vmatprep.subr.bf16.mxu0 0
      %903 = vmatpush1.bf16.msra.mxu0 %v854
      %904 = vmatprep.subr.bf16.mxu0 0
      %905 = vmatpush1.bf16.msra.mxu0 %v855
      %906 = vmatprep.subr.bf16.mxu0 0
      %907 = vmatpush1.bf16.msra.mxu0 %v856
      %908 = vmatprep.subr.bf16.mxu0 0
      %909 = vmatpush1.bf16.msra.mxu0 %v857
      %910 = vmatprep.subr.bf16.mxu0 0
      %911 = vmatpush1.bf16.msra.mxu0 %v858
      %912 = vmatprep.subr.bf16.mxu0 0
      %913 = vmatpush1.bf16.msra.mxu0 %v859
      %914 = vmatprep.subr.bf16.mxu0 0
      %915 = vmatpush1.bf16.msra.mxu0 %v860
      %916 = vmatprep.subr.bf16.mxu0 0
      %917 = vmatpush1.bf16.msra.mxu0 %v861
      %918 = vmatprep.subr.bf16.mxu0 0
      %919 = vmatpush1.bf16.msra.mxu0 %v862
      %920 = vmatprep.subr.bf16.mxu0 0
      %921 = vmatpush1.bf16.msra.mxu0 %v863
      %922 = vmatprep.subr.bf16.mxu0 0
      %923 = vmatpush1.bf16.msra.mxu0 %v864
      %924 = vmatprep.subr.bf16.mxu0 0
      %925 = vmatpush1.bf16.msra.mxu0 %v865
      %926 = vmatprep.subr.bf16.mxu0 0
      %927 = vmatpush1.bf16.msra.mxu0 %v866
      %928 = vmatprep.subr.bf16.mxu0 0
      %929 = vmatpush1.bf16.msra.mxu0 %v867
      %930 = vmatprep.subr.bf16.mxu0 0
      %931 = vmatpush1.bf16.msra.mxu0 %v868
      %932 = vmatprep.subr.bf16.mxu0 0
      %933 = vmatpush1.bf16.msra.mxu0 %v869
      %934 = vmatprep.mubr.bf16.mxu0 %v741
      %935 = vmatmul.mubr.bf16.gmra.mrb[0].mxu0 %v740
      %v936 = vpop.f32.mrb[0].mxu0
      %v937 = vadd.f32 %v756, %v936
      %v938 = vpop.f32.mrb[0].mxu0
      %v939 = vpop.f32.mrb[0].mxu0
      %v940 = vadd.f32 %v756, %v939
      %v941 = vpop.f32.mrb[0].mxu0
      %942 = vmatprep.mubr.bf16.mxu0 %v744
      %943 = vmatmul.mubr.bf16.gmra.mrb[0].mxu0 %v743
      %v944 = vpop.f32.mrb[0].mxu0
      %v945 = vadd.f32 %v756, %v944
      %v946 = vpop.f32.mrb[0].mxu0
      %v947 = vpop.f32.mrb[0].mxu0
      %v948 = vadd.f32 %v756, %v947
      %v949 = vpop.f32.mrb[0].mxu0
      %950 = vmatprep.mubr.bf16.mxu0 %v747
      %951 = vmatmul.mubr.bf16.gmra.mrb[0].mxu0 %v746
      %v952 = vpop.f32.mrb[0].mxu0
      %v953 = vadd.f32 %v756, %v952
      %v954 = vpop.f32.mrb[0].mxu0
      %v955 = vpop.f32.mrb[0].mxu0
      %v956 = vadd.f32 %v756, %v955
      %v957 = vpop.f32.mrb[0].mxu0
      %958 = vmatprep.mubr.bf16.mxu0 %v750
      %959 = vmatmul.mubr.bf16.gmra.mrb[0].mxu0 %v749
      %v960 = vpop.f32.mrb[0].mxu0
      %v961 = vadd.f32 %v756, %v960
      %v962 = vpop.f32.mrb[0].mxu0
      %v963 = vpop.f32.mrb[0].mxu0
      %v964 = vadd.f32 %v756, %v963
      %v965 = vpop.f32.mrb[0].mxu0
      %966 = vdwg.mxu0
      %967 = vmatprep.subr.bf16.mxu0 0
      %968 = vmatpush1.bf16.msra.mxu0 %v870
      %969 = vmatprep.subr.bf16.mxu0 0
      %970 = vmatpush1.bf16.msra.mxu0 %v871
      %971 = vmatprep.subr.bf16.mxu0 0
      %972 = vmatpush1.bf16.msra.mxu0 %v872
      %973 = vmatprep.subr.bf16.mxu0 0
      %974 = vmatpush1.bf16.msra.mxu0 %v873
      %975 = vmatprep.subr.bf16.mxu0 0
      %976 = vmatpush1.bf16.msra.mxu0 %v874
      %977 = vmatprep.subr.bf16.mxu0 0
      %978 = vmatpush1.bf16.msra.mxu0 %v875
      %979 = vmatprep.subr.bf16.mxu0 0
      %980 = vmatpush1.bf16.msra.mxu0 %v876
      %981 = vmatprep.subr.bf16.mxu0 0
      %982 = vmatpush1.bf16.msra.mxu0 %v877
      %983 = vmatprep.subr.bf16.mxu0 0
      %984 = vmatpush1.bf16.msra.mxu0 0
      %985 = vmatprep.subr.bf16.mxu0 0
      %986 = vmatpush1.bf16.msra.mxu0 0
      %987 = vmatprep.subr.bf16.mxu0 0
      %988 = vmatpush1.bf16.msra.mxu0 0
      %989 = vmatprep.subr.bf16.mxu0 0
      %990 = vmatpush1.bf16.msra.mxu0 0
      %991 = vmatprep.subr.bf16.mxu0 0
      %992 = vmatpush1.bf16.msra.mxu0 0
      %993 = vmatprep.subr.bf16.mxu0 0
      %994 = vmatpush1.bf16.msra.mxu0 0
      %995 = vmatprep.subr.bf16.mxu0 0
      %996 = vmatpush1.bf16.msra.mxu0 0
      %997 = vmatprep.subr.bf16.mxu0 0
      %998 = vmatpush1.bf16.msra.mxu0 0
      %999 = vmatprep.mubr.bf16.mxu0 0
      %1000 = vmatmul.mubr.bf16.gmra.mrb[0].mxu0 %v742
      %v1001 = vpop.f32.mrb[0].mxu0
      %v1002 = vadd.f32 %v937, %v1001
      %v1003 = vpop.f32.mrb[0].mxu0
      %v1004 = vpop.f32.mrb[0].mxu0
      %v1005 = vadd.f32 %v940, %v1004
      %v1006 = vpop.f32.mrb[0].mxu0
      %1007 = vmatprep.mubr.bf16.mxu0 0
      %1008 = vmatmul.mubr.bf16.gmra.mrb[0].mxu0 %v745
      %v1009 = vpop.f32.mrb[0].mxu0
      %v1010 = vadd.f32 %v945, %v1009
      %v1011 = vpop.f32.mrb[0].mxu0
      %v1012 = vpop.f32.mrb[0].mxu0
      %v1013 = vadd.f32 %v948, %v1012
      %v1014 = vpop.f32.mrb[0].mxu0
      %1015 = vmatprep.mubr.bf16.mxu0 0
      %1016 = vmatmul.mubr.bf16.gmra.mrb[0].mxu0 %v748
      %v1017 = vpop.f32.mrb[0].mxu0
      %v1018 = vadd.f32 %v953, %v1017
      %v1019 = vpop.f32.mrb[0].mxu0
      %v1020 = vpop.f32.mrb[0].mxu0
      %v1021 = vadd.f32 %v956, %v1020
      %v1022 = vpop.f32.mrb[0].mxu0
      %1023 = vmatprep.mubr.bf16.mxu0 0
      %1024 = vmatmul.mubr.bf16.gmra.mrb[0].mxu0 %v751
      %v1025 = vpop.f32.mrb[0].mxu0
      %v1026 = vadd.f32 %v961, %v1025
      %v1027 = vpop.f32.mrb[0].mxu0
      %v1028 = vpop.f32.mrb[0].mxu0
      %v1029 = vadd.f32 %v964, %v1028
      %v1030 = vpop.f32.mrb[0].mxu0
      %1031 = vdwg.mxu0
      %v1032 = vadd.f32 %v229, %v1002
      %v1033 = vadd.f32 %v230, %v1005
      %v1034 = vadd.f32 %v231, %v1010
      %v1035 = vadd.f32 %v232, %v1013
      %v1036 = vadd.f32 %v233, %v1018
      %v1037 = vadd.f32 %v234, %v1021
      %v1038 = vadd.f32 %v235, %v1026
      %v1039 = vadd.f32 %v236, %v1029
      %s1040 = scalar_lea.vmem %s1, 192
      %v1041 = vld [vmem:[%s1040] sm:$0xf]
      %v1042 = vld [vmem:[%s1040 + $0x4] sm:$0xf]
      %v1043 = vld [vmem:[%s1040 + $0x8] sm:$0xf]
      %v1044 = vld [vmem:[%s1040 + $0xc] sm:$0xf]
      %v1045 = vld [vmem:[%s1040 + $0x10] sm:$0xf]
      %v1046 = vld [vmem:[%s1040 + $0x14] sm:$0xf]
      %v1047 = vld [vmem:[%s1040 + $0x18] sm:$0xf]
      %v1048 = vld [vmem:[%s1040 + $0x1c] sm:$0xf]
      %v1049 = vld [vmem:[%s1040 + $0x20] sm:$0xf]
      %v1050 = vld [vmem:[%s1040 + $0x24] sm:$0xf]
      %v1051 = vld [vmem:[%s1040 + $0x28] sm:$0xf]
      %v1052 = vld [vmem:[%s1040 + $0x2c] sm:$0xf]
      %v1053 = vld [vmem:[%s1040 + $0x30] sm:$0xf]
      %v1054 = vld [vmem:[%s1040 + $0x34] sm:$0xf]
      %v1055 = vld [vmem:[%s1040 + $0x38] sm:$0xf]
      %v1056 = vld [vmem:[%s1040 + $0x3c] sm:$0xf]
      %v1057 = vld [vmem:[%s1040 + $0x40] sm:$0xf]
      %v1058 = vld [vmem:[%s1040 + $0x44] sm:$0xf]
      %v1059 = vld [vmem:[%s1040 + $0x48] sm:$0xf]
      %v1060 = vld [vmem:[%s1040 + $0x4c] sm:$0xf]
      %v1061 = vld [vmem:[%s1040 + $0x50] sm:$0xf]
      %v1062 = vld [vmem:[%s1040 + $0x54] sm:$0xf]
      %v1063 = vld [vmem:[%s1040 + $0x58] sm:$0xf]
      %v1064 = vld [vmem:[%s1040 + $0x5c] sm:$0xf]
      %v1065 = vld [vmem:[%s1040 + $0x60] sm:$0xf]
      %v1066 = vld [vmem:[%s1040 + $0x64] sm:$0xf]
      %v1067 = vld [vmem:[%s1040 + $0x68] sm:$0xf]
      %v1068 = vld [vmem:[%s1040 + $0x6c] sm:$0xf]
      %v1069 = vld [vmem:[%s1040 + $0x70] sm:$0xf]
      %v1070 = vld [vmem:[%s1040 + $0x74] sm:$0xf]
      %v1071 = vld [vmem:[%s1040 + $0x78] sm:$0xf]
      %v1072 = vld [vmem:[%s1040 + $0x7c] sm:$0xf]
      %v1073 = vld [vmem:[%s1040 + $0x80] sm:$0xf]
      %v1074 = vld [vmem:[%s1040 + $0x84] sm:$0xf]
      %v1075 = vld [vmem:[%s1040 + $0x88] sm:$0xf]
      %v1076 = vld [vmem:[%s1040 + $0x8c] sm:$0xf]
      %v1077 = vld [vmem:[%s1040 + $0x90] sm:$0xf]
      %v1078 = vld [vmem:[%s1040 + $0x94] sm:$0xf]
      %v1079 = vld [vmem:[%s1040 + $0x98] sm:$0xf]
      %v1080 = vld [vmem:[%s1040 + $0x9c] sm:$0xf]
      %v1081 = vld [vmem:[%s1040 + $0xa0] sm:$0xf]
      %v1082 = vld [vmem:[%s1040 + $0xa4] sm:$0xf]
      %v1083 = vld [vmem:[%s1040 + $0xa8] sm:$0xf]
      %v1084 = vld [vmem:[%s1040 + $0xac] sm:$0xf]
      %v1085 = vld [vmem:[%s1040 + $0xb0] sm:$0xf]
      %v1086 = vld [vmem:[%s1040 + $0xb4] sm:$0xf]
      %v1087 = vld [vmem:[%s1040 + $0xb8] sm:$0xf]
      %v1088 = vld [vmem:[%s1040 + $0xbc] sm:$0xf]
      %s1089 = scalar_lea.vmem %s2, 1
      %v1090 = vld [vmem:[%s1089] sm:$0x1]
      %v1091 = vrot.slane %v1032, 7
      %v1092 = vrot.slane %v1033, 7
      %v1093 = vrot.slane %v1034, 7
      %v1094 = vrot.slane %v1035, 7
      %v1095 = vrot.slane %v1036, 7
      %v1096 = vrot.slane %v1037, 7
      %v1097 = vrot.slane %v1038, 7
      %v1098 = vrot.slane %v1039, 7
      %v1099 = vsel %vm301, %v1097, %v1098
      %v1100 = vsel %vm301, %v1096, %v1097
      %v1101 = vsel %vm301, %v1095, %v1096
      %v1102 = vsel %vm301, %v1094, %v1095
      %v1103 = vsel %vm301, %v1093, %v1094
      %v1104 = vsel %vm301, %v1092, %v1093
      %v1105 = vsel %vm301, %v1091, %v1092
      %v1106 = vsel %vm301, %v1098, %v1091
      %v1107 = vsel %vm240, 0.0, %v1106
      %v1108 = vsel %vm241, 0.0, %v1105
      %v1109 = vsel %vm240, 0.0, %v1104
      %v1110 = vsel %vm241, 0.0, %v1103
      %v1111 = vsel %vm240, 0.0, %v1102
      %v1112 = vsel %vm241, 0.0, %v1101
      %v1113 = vsel %vm240, 0.0, %v1100
      %v1114 = vsel %vm241, 0.0, %v1099
      %v1115 = vrot.slane %v1032, 1
      %v1116 = vrot.slane %v1033, 1
      %v1117 = vrot.slane %v1034, 1
      %v1118 = vrot.slane %v1035, 1
      %v1119 = vrot.slane %v1036, 1
      %v1120 = vrot.slane %v1037, 1
      %v1121 = vrot.slane %v1038, 1
      %v1122 = vrot.slane %v1039, 1
      %v1123 = vsel %vm326, %v1121, %v1122
      %v1124 = vsel %vm326, %v1120, %v1121
      %v1125 = vsel %vm326, %v1119, %v1120
      %v1126 = vsel %vm326, %v1118, %v1119
      %v1127 = vsel %vm326, %v1117, %v1118
      %v1128 = vsel %vm326, %v1116, %v1117
      %v1129 = vsel %vm326, %v1115, %v1116
      %v1130 = vsel %vm326, %v1122, %v1115
      %v1131 = vsel %vm242, 0.0, %v1129
      %v1132 = vsel %vm243, 0.0, %v1128
      %v1133 = vsel %vm242, 0.0, %v1127
      %v1134 = vsel %vm243, 0.0, %v1126
      %v1135 = vsel %vm242, 0.0, %v1125
      %v1136 = vsel %vm243, 0.0, %v1124
      %v1137 = vsel %vm242, 0.0, %v1123
      %v1138 = vsel %vm243, 0.0, %v1130
      %v1139 = vpack.c.bf16 %v1108, %v1107
      %v1140 = vpack.c.bf16 %v1033, %v1032
      %v1141 = vpack.c.bf16 %v1132, %v1131
      %v1142 = vpack.c.bf16 %v1110, %v1109
      %v1143 = vpack.c.bf16 %v1035, %v1034
      %v1144 = vpack.c.bf16 %v1134, %v1133
      %v1145 = vpack.c.bf16 %v1112, %v1111
      %v1146 = vpack.c.bf16 %v1037, %v1036
      %v1147 = vpack.c.bf16 %v1136, %v1135
      %v1148 = vpack.c.bf16 %v1114, %v1113
      %v1149 = vpack.c.bf16 %v1039, %v1038
      %v1150 = vpack.c.bf16 %v1138, %v1137
      %v1152 = vlaneseq
      %v1153 = vshrl.u32 %v1152, 7
      %v1154 = vsub.s32 0, %v1153
      %v1155 = vrot.slane %v1090, %v1154
      %v1205 = vunpack.c.l.b16 %v1041
      %v1206 = vunpack.c.l.b16 %v1042
      %v1207 = vunpack.c.l.b16 %v1043
      %v1208 = vunpack.c.l.b16 %v1044
      %v1209 = vunpack.c.l.b16 %v1045
      %v1210 = vunpack.c.l.b16 %v1046
      %v1211 = vunpack.c.l.b16 %v1047
      %v1212 = vunpack.c.l.b16 %v1048
      %v1213 = vunpack.c.l.b16 %v1049
      %v1214 = vunpack.c.l.b16 %v1050
      %v1215 = vunpack.c.l.b16 %v1051
      %v1216 = vunpack.c.l.b16 %v1052
      %v1217 = vunpack.c.l.b16 %v1053
      %v1218 = vunpack.c.l.b16 %v1054
      %v1219 = vunpack.c.l.b16 %v1055
      %v1220 = vunpack.c.l.b16 %v1056
      %v1221 = vunpack.c.l.b16 %v1057
      %v1222 = vunpack.c.l.b16 %v1058
      %v1223 = vunpack.c.l.b16 %v1059
      %v1224 = vunpack.c.l.b16 %v1060
      %v1225 = vunpack.c.l.b16 %v1061
      %v1226 = vunpack.c.l.b16 %v1062
      %v1227 = vunpack.c.l.b16 %v1063
      %v1228 = vunpack.c.l.b16 %v1064
      %v1229 = vunpack.c.l.b16 %v1065
      %v1230 = vunpack.c.l.b16 %v1066
      %v1231 = vunpack.c.l.b16 %v1067
      %v1232 = vunpack.c.l.b16 %v1068
      %v1233 = vunpack.c.l.b16 %v1069
      %v1234 = vunpack.c.l.b16 %v1070
      %v1235 = vunpack.c.l.b16 %v1071
      %v1236 = vunpack.c.l.b16 %v1072
      %v1237 = vunpack.c.l.b16 %v1073
      %v1238 = vunpack.c.l.b16 %v1074
      %v1239 = vunpack.c.l.b16 %v1075
      %v1240 = vunpack.c.l.b16 %v1076
      %v1241 = vunpack.c.l.b16 %v1077
      %v1242 = vunpack.c.l.b16 %v1078
      %v1243 = vunpack.c.l.b16 %v1079
      %v1244 = vunpack.c.l.b16 %v1080
      %v1245 = vunpack.c.l.b16 %v1081
      %v1246 = vunpack.c.l.b16 %v1082
      %v1247 = vunpack.c.l.b16 %v1083
      %v1248 = vunpack.c.l.b16 %v1084
      %v1249 = vunpack.c.l.b16 %v1085
      %v1250 = vunpack.c.l.b16 %v1086
      %v1251 = vunpack.c.l.b16 %v1087
      %v1252 = vunpack.c.l.b16 %v1088
      %v1253 = vpack.c.b16 %v1206, %v1205
      %v1254 = vpack.c.b16 %v1208, %v1207
      %v1255 = vpack.c.b16 %v1210, %v1209
      %v1256 = vpack.c.b16 %v1212, %v1211
      %v1257 = vpack.c.b16 %v1214, %v1213
      %v1258 = vpack.c.b16 %v1216, %v1215
      %v1259 = vpack.c.b16 %v1218, %v1217
      %v1260 = vpack.c.b16 %v1220, %v1219
      %v1261 = vpack.c.b16 %v1222, %v1221
      %v1262 = vpack.c.b16 %v1224, %v1223
      %v1263 = vpack.c.b16 %v1226, %v1225
      %v1264 = vpack.c.b16 %v1228, %v1227
      %v1265 = vpack.c.b16 %v1230, %v1229
      %v1266 = vpack.c.b16 %v1232, %v1231
      %v1267 = vpack.c.b16 %v1234, %v1233
      %v1268 = vpack.c.b16 %v1236, %v1235
      %v1269 = vpack.c.b16 %v1238, %v1237
      %v1270 = vpack.c.b16 %v1240, %v1239
      %v1271 = vpack.c.b16 %v1242, %v1241
      %v1272 = vpack.c.b16 %v1244, %v1243
      %v1273 = vpack.c.b16 %v1246, %v1245
      %v1274 = vpack.c.b16 %v1248, %v1247
      %v1275 = vpack.c.b16 %v1250, %v1249
      %v1276 = vpack.c.b16 %v1252, %v1251
      %1301 = vmatprep.subr.bf16.mxu0 0
      %1302 = vmatpush1.bf16.msra.mxu0 %v1253
      %1303 = vmatprep.subr.bf16.mxu0 0
      %1304 = vmatpush1.bf16.msra.mxu0 %v1254
      %1305 = vmatprep.subr.bf16.mxu0 0
      %1306 = vmatpush1.bf16.msra.mxu0 %v1255
      %1307 = vmatprep.subr.bf16.mxu0 0
      %1308 = vmatpush1.bf16.msra.mxu0 %v1256
      %1309 = vmatprep.subr.bf16.mxu0 0
      %1310 = vmatpush1.bf16.msra.mxu0 %v1257
      %1311 = vmatprep.subr.bf16.mxu0 0
      %1312 = vmatpush1.bf16.msra.mxu0 %v1258
      %1313 = vmatprep.subr.bf16.mxu0 0
      %1314 = vmatpush1.bf16.msra.mxu0 %v1259
      %1315 = vmatprep.subr.bf16.mxu0 0
      %1316 = vmatpush1.bf16.msra.mxu0 %v1260
      %1317 = vmatprep.subr.bf16.mxu0 0
      %1318 = vmatpush1.bf16.msra.mxu0 %v1261
      %1319 = vmatprep.subr.bf16.mxu0 0
      %1320 = vmatpush1.bf16.msra.mxu0 %v1262
      %1321 = vmatprep.subr.bf16.mxu0 0
      %1322 = vmatpush1.bf16.msra.mxu0 %v1263
      %1323 = vmatprep.subr.bf16.mxu0 0
      %1324 = vmatpush1.bf16.msra.mxu0 %v1264
      %1325 = vmatprep.subr.bf16.mxu0 0
      %1326 = vmatpush1.bf16.msra.mxu0 %v1265
      %1327 = vmatprep.subr.bf16.mxu0 0
      %1328 = vmatpush1.bf16.msra.mxu0 %v1266
      %1329 = vmatprep.subr.bf16.mxu0 0
      %1330 = vmatpush1.bf16.msra.mxu0 %v1267
      %1331 = vmatprep.subr.bf16.mxu0 0
      %1332 = vmatpush1.bf16.msra.mxu0 %v1268
      %1333 = vmatprep.mubr.bf16.mxu0 %v1140
      %1334 = vmatmul.mubr.bf16.gmra.mrb[0].mxu0 %v1139
      %v1335 = vpop.f32.mrb[0].mxu0
      %v1336 = vadd.f32 %v1155, %v1335
      %v1337 = vpop.f32.mrb[0].mxu0
      %v1338 = vpop.f32.mrb[0].mxu0
      %v1339 = vadd.f32 %v1155, %v1338
      %v1340 = vpop.f32.mrb[0].mxu0
      %1341 = vmatprep.mubr.bf16.mxu0 %v1143
      %1342 = vmatmul.mubr.bf16.gmra.mrb[0].mxu0 %v1142
      %v1343 = vpop.f32.mrb[0].mxu0
      %v1344 = vadd.f32 %v1155, %v1343
      %v1345 = vpop.f32.mrb[0].mxu0
      %v1346 = vpop.f32.mrb[0].mxu0
      %v1347 = vadd.f32 %v1155, %v1346
      %v1348 = vpop.f32.mrb[0].mxu0
      %1349 = vmatprep.mubr.bf16.mxu0 %v1146
      %1350 = vmatmul.mubr.bf16.gmra.mrb[0].mxu0 %v1145
      %v1351 = vpop.f32.mrb[0].mxu0
      %v1352 = vadd.f32 %v1155, %v1351
      %v1353 = vpop.f32.mrb[0].mxu0
      %v1354 = vpop.f32.mrb[0].mxu0
      %v1355 = vadd.f32 %v1155, %v1354
      %v1356 = vpop.f32.mrb[0].mxu0
      %1357 = vmatprep.mubr.bf16.mxu0 %v1149
      %1358 = vmatmul.mubr.bf16.gmra.mrb[0].mxu0 %v1148
      %v1359 = vpop.f32.mrb[0].mxu0
      %v1360 = vadd.f32 %v1155, %v1359
      %v1361 = vpop.f32.mrb[0].mxu0
      %v1362 = vpop.f32.mrb[0].mxu0
      %v1363 = vadd.f32 %v1155, %v1362
      %v1364 = vpop.f32.mrb[0].mxu0
      %1365 = vdwg.mxu0
      %1366 = vmatprep.subr.bf16.mxu0 0
      %1367 = vmatpush1.bf16.msra.mxu0 %v1269
      %1368 = vmatprep.subr.bf16.mxu0 0
      %1369 = vmatpush1.bf16.msra.mxu0 %v1270
      %1370 = vmatprep.subr.bf16.mxu0 0
      %1371 = vmatpush1.bf16.msra.mxu0 %v1271
      %1372 = vmatprep.subr.bf16.mxu0 0
      %1373 = vmatpush1.bf16.msra.mxu0 %v1272
      %1374 = vmatprep.subr.bf16.mxu0 0
      %1375 = vmatpush1.bf16.msra.mxu0 %v1273
      %1376 = vmatprep.subr.bf16.mxu0 0
      %1377 = vmatpush1.bf16.msra.mxu0 %v1274
      %1378 = vmatprep.subr.bf16.mxu0 0
      %1379 = vmatpush1.bf16.msra.mxu0 %v1275
      %1380 = vmatprep.subr.bf16.mxu0 0
      %1381 = vmatpush1.bf16.msra.mxu0 %v1276
      %1382 = vmatprep.subr.bf16.mxu0 0
      %1383 = vmatpush1.bf16.msra.mxu0 0
      %1384 = vmatprep.subr.bf16.mxu0 0
      %1385 = vmatpush1.bf16.msra.mxu0 0
      %1386 = vmatprep.subr.bf16.mxu0 0
      %1387 = vmatpush1.bf16.msra.mxu0 0
      %1388 = vmatprep.subr.bf16.mxu0 0
      %1389 = vmatpush1.bf16.msra.mxu0 0
      %1390 = vmatprep.subr.bf16.mxu0 0
      %1391 = vmatpush1.bf16.msra.mxu0 0
      %1392 = vmatprep.subr.bf16.mxu0 0
      %1393 = vmatpush1.bf16.msra.mxu0 0
      %1394 = vmatprep.subr.bf16.mxu0 0
      %1395 = vmatpush1.bf16.msra.mxu0 0
      %1396 = vmatprep.subr.bf16.mxu0 0
      %1397 = vmatpush1.bf16.msra.mxu0 0
      %1398 = vmatprep.mubr.bf16.mxu0 0
      %1399 = vmatmul.mubr.bf16.gmra.mrb[0].mxu0 %v1141
      %v1400 = vpop.f32.mrb[0].mxu0
      %v1401 = vadd.f32 %v1336, %v1400
      %v1402 = vpop.f32.mrb[0].mxu0
      %v1403 = vpop.f32.mrb[0].mxu0
      %v1404 = vadd.f32 %v1339, %v1403
      %v1405 = vpop.f32.mrb[0].mxu0
      %1406 = vmatprep.mubr.bf16.mxu0 0
      %1407 = vmatmul.mubr.bf16.gmra.mrb[0].mxu0 %v1144
      %v1408 = vpop.f32.mrb[0].mxu0
      %v1409 = vadd.f32 %v1344, %v1408
      %v1410 = vpop.f32.mrb[0].mxu0
      %v1411 = vpop.f32.mrb[0].mxu0
      %v1412 = vadd.f32 %v1347, %v1411
      %v1413 = vpop.f32.mrb[0].mxu0
      %1414 = vmatprep.mubr.bf16.mxu0 0
      %1415 = vmatmul.mubr.bf16.gmra.mrb[0].mxu0 %v1147
      %v1416 = vpop.f32.mrb[0].mxu0
      %v1417 = vadd.f32 %v1352, %v1416
      %v1418 = vpop.f32.mrb[0].mxu0
      %v1419 = vpop.f32.mrb[0].mxu0
      %v1420 = vadd.f32 %v1355, %v1419
      %v1421 = vpop.f32.mrb[0].mxu0
      %1422 = vmatprep.mubr.bf16.mxu0 0
      %1423 = vmatmul.mubr.bf16.gmra.mrb[0].mxu0 %v1150
      %v1424 = vpop.f32.mrb[0].mxu0
      %v1425 = vadd.f32 %v1360, %v1424
      %v1426 = vpop.f32.mrb[0].mxu0
      %v1427 = vpop.f32.mrb[0].mxu0
      %v1428 = vadd.f32 %v1363, %v1427
      %v1429 = vpop.f32.mrb[0].mxu0
      %1430 = vdwg.mxu0
      %v1431 = vmax.f32 %v1401, 0.0
      %v1432 = vmax.f32 %v1404, 0.0
      %v1433 = vmax.f32 %v1409, 0.0
      %v1434 = vmax.f32 %v1412, 0.0
      %v1435 = vmax.f32 %v1417, 0.0
      %v1436 = vmax.f32 %v1420, 0.0
      %v1437 = vmax.f32 %v1425, 0.0
      %v1438 = vmax.f32 %v1428, 0.0
      %s1439 = scalar_lea.vmem %s3, 192
      %v1440 = vld [vmem:[%s1439] sm:$0xf]
      %v1441 = vld [vmem:[%s1439 + $0x4] sm:$0xf]
      %v1442 = vld [vmem:[%s1439 + $0x8] sm:$0xf]
      %v1443 = vld [vmem:[%s1439 + $0xc] sm:$0xf]
      %v1444 = vld [vmem:[%s1439 + $0x10] sm:$0xf]
      %v1445 = vld [vmem:[%s1439 + $0x14] sm:$0xf]
      %v1446 = vld [vmem:[%s1439 + $0x18] sm:$0xf]
      %v1447 = vld [vmem:[%s1439 + $0x1c] sm:$0xf]
      %v1448 = vld [vmem:[%s1439 + $0x20] sm:$0xf]
      %v1449 = vld [vmem:[%s1439 + $0x24] sm:$0xf]
      %v1450 = vld [vmem:[%s1439 + $0x28] sm:$0xf]
      %v1451 = vld [vmem:[%s1439 + $0x2c] sm:$0xf]
      %v1452 = vld [vmem:[%s1439 + $0x30] sm:$0xf]
      %v1453 = vld [vmem:[%s1439 + $0x34] sm:$0xf]
      %v1454 = vld [vmem:[%s1439 + $0x38] sm:$0xf]
      %v1455 = vld [vmem:[%s1439 + $0x3c] sm:$0xf]
      %v1456 = vld [vmem:[%s1439 + $0x40] sm:$0xf]
      %v1457 = vld [vmem:[%s1439 + $0x44] sm:$0xf]
      %v1458 = vld [vmem:[%s1439 + $0x48] sm:$0xf]
      %v1459 = vld [vmem:[%s1439 + $0x4c] sm:$0xf]
      %v1460 = vld [vmem:[%s1439 + $0x50] sm:$0xf]
      %v1461 = vld [vmem:[%s1439 + $0x54] sm:$0xf]
      %v1462 = vld [vmem:[%s1439 + $0x58] sm:$0xf]
      %v1463 = vld [vmem:[%s1439 + $0x5c] sm:$0xf]
      %v1464 = vld [vmem:[%s1439 + $0x60] sm:$0xf]
      %v1465 = vld [vmem:[%s1439 + $0x64] sm:$0xf]
      %v1466 = vld [vmem:[%s1439 + $0x68] sm:$0xf]
      %v1467 = vld [vmem:[%s1439 + $0x6c] sm:$0xf]
      %v1468 = vld [vmem:[%s1439 + $0x70] sm:$0xf]
      %v1469 = vld [vmem:[%s1439 + $0x74] sm:$0xf]
      %v1470 = vld [vmem:[%s1439 + $0x78] sm:$0xf]
      %v1471 = vld [vmem:[%s1439 + $0x7c] sm:$0xf]
      %v1472 = vld [vmem:[%s1439 + $0x80] sm:$0xf]
      %v1473 = vld [vmem:[%s1439 + $0x84] sm:$0xf]
      %v1474 = vld [vmem:[%s1439 + $0x88] sm:$0xf]
      %v1475 = vld [vmem:[%s1439 + $0x8c] sm:$0xf]
      %v1476 = vld [vmem:[%s1439 + $0x90] sm:$0xf]
      %v1477 = vld [vmem:[%s1439 + $0x94] sm:$0xf]
      %v1478 = vld [vmem:[%s1439 + $0x98] sm:$0xf]
      %v1479 = vld [vmem:[%s1439 + $0x9c] sm:$0xf]
      %v1480 = vld [vmem:[%s1439 + $0xa0] sm:$0xf]
      %v1481 = vld [vmem:[%s1439 + $0xa4] sm:$0xf]
      %v1482 = vld [vmem:[%s1439 + $0xa8] sm:$0xf]
      %v1483 = vld [vmem:[%s1439 + $0xac] sm:$0xf]
      %v1484 = vld [vmem:[%s1439 + $0xb0] sm:$0xf]
      %v1485 = vld [vmem:[%s1439 + $0xb4] sm:$0xf]
      %v1486 = vld [vmem:[%s1439 + $0xb8] sm:$0xf]
      %v1487 = vld [vmem:[%s1439 + $0xbc] sm:$0xf]
      %s1488 = scalar_lea.vmem %s4, 1
      %v1489 = vld [vmem:[%s1488] sm:$0x1]
      %v1490 = vrot.slane %v1431, 7
      %v1491 = vrot.slane %v1432, 7
      %v1492 = vrot.slane %v1433, 7
      %v1493 = vrot.slane %v1434, 7
      %v1494 = vrot.slane %v1435, 7
      %v1495 = vrot.slane %v1436, 7
      %v1496 = vrot.slane %v1437, 7
      %v1497 = vrot.slane %v1438, 7
      %v1498 = vsel %vm301, %v1496, %v1497
      %v1499 = vsel %vm301, %v1495, %v1496
      %v1500 = vsel %vm301, %v1494, %v1495
      %v1501 = vsel %vm301, %v1493, %v1494
      %v1502 = vsel %vm301, %v1492, %v1493
      %v1503 = vsel %vm301, %v1491, %v1492
      %v1504 = vsel %vm301, %v1490, %v1491
      %v1505 = vsel %vm301, %v1497, %v1490
      %v1506 = vsel %vm240, 0.0, %v1505
      %v1507 = vsel %vm241, 0.0, %v1504
      %v1508 = vsel %vm240, 0.0, %v1503
      %v1509 = vsel %vm241, 0.0, %v1502
      %v1510 = vsel %vm240, 0.0, %v1501
      %v1511 = vsel %vm241, 0.0, %v1500
      %v1512 = vsel %vm240, 0.0, %v1499
      %v1513 = vsel %vm241, 0.0, %v1498
      %v1514 = vrot.slane %v1431, 1
      %v1515 = vrot.slane %v1432, 1
      %v1516 = vrot.slane %v1433, 1
      %v1517 = vrot.slane %v1434, 1
      %v1518 = vrot.slane %v1435, 1
      %v1519 = vrot.slane %v1436, 1
      %v1520 = vrot.slane %v1437, 1
      %v1521 = vrot.slane %v1438, 1
      %v1522 = vsel %vm326, %v1520, %v1521
      %v1523 = vsel %vm326, %v1519, %v1520
      %v1524 = vsel %vm326, %v1518, %v1519
      %v1525 = vsel %vm326, %v1517, %v1518
      %v1526 = vsel %vm326, %v1516, %v1517
      %v1527 = vsel %vm326, %v1515, %v1516
      %v1528 = vsel %vm326, %v1514, %v1515
      %v1529 = vsel %vm326, %v1521, %v1514
      %v1530 = vsel %vm242, 0.0, %v1528
      %v1531 = vsel %vm243, 0.0, %v1527
      %v1532 = vsel %vm242, 0.0, %v1526
      %v1533 = vsel %vm243, 0.0, %v1525
      %v1534 = vsel %vm242, 0.0, %v1524
      %v1535 = vsel %vm243, 0.0, %v1523
      %v1536 = vsel %vm242, 0.0, %v1522
      %v1537 = vsel %vm243, 0.0, %v1529
      %v1538 = vpack.c.bf16 %v1507, %v1506
      %v1539 = vpack.c.bf16 %v1432, %v1431
      %v1540 = vpack.c.bf16 %v1531, %v1530
      %v1541 = vpack.c.bf16 %v1509, %v1508
      %v1542 = vpack.c.bf16 %v1434, %v1433
      %v1543 = vpack.c.bf16 %v1533, %v1532
      %v1544 = vpack.c.bf16 %v1511, %v1510
      %v1545 = vpack.c.bf16 %v1436, %v1435
      %v1546 = vpack.c.bf16 %v1535, %v1534
      %v1547 = vpack.c.bf16 %v1513, %v1512
      %v1548 = vpack.c.bf16 %v1438, %v1437
      %v1549 = vpack.c.bf16 %v1537, %v1536
      %v1551 = vlaneseq
      %v1552 = vshrl.u32 %v1551, 7
      %v1553 = vsub.s32 0, %v1552
      %v1554 = vrot.slane %v1489, %v1553
      %v1604 = vunpack.c.l.b16 %v1440
      %v1605 = vunpack.c.l.b16 %v1441
      %v1606 = vunpack.c.l.b16 %v1442
      %v1607 = vunpack.c.l.b16 %v1443
      %v1608 = vunpack.c.l.b16 %v1444
      %v1609 = vunpack.c.l.b16 %v1445
      %v1610 = vunpack.c.l.b16 %v1446
      %v1611 = vunpack.c.l.b16 %v1447
      %v1612 = vunpack.c.l.b16 %v1448
      %v1613 = vunpack.c.l.b16 %v1449
      %v1614 = vunpack.c.l.b16 %v1450
      %v1615 = vunpack.c.l.b16 %v1451
      %v1616 = vunpack.c.l.b16 %v1452
      %v1617 = vunpack.c.l.b16 %v1453
      %v1618 = vunpack.c.l.b16 %v1454
      %v1619 = vunpack.c.l.b16 %v1455
      %v1620 = vunpack.c.l.b16 %v1456
      %v1621 = vunpack.c.l.b16 %v1457
      %v1622 = vunpack.c.l.b16 %v1458
      %v1623 = vunpack.c.l.b16 %v1459
      %v1624 = vunpack.c.l.b16 %v1460
      %v1625 = vunpack.c.l.b16 %v1461
      %v1626 = vunpack.c.l.b16 %v1462
      %v1627 = vunpack.c.l.b16 %v1463
      %v1628 = vunpack.c.l.b16 %v1464
      %v1629 = vunpack.c.l.b16 %v1465
      %v1630 = vunpack.c.l.b16 %v1466
      %v1631 = vunpack.c.l.b16 %v1467
      %v1632 = vunpack.c.l.b16 %v1468
      %v1633 = vunpack.c.l.b16 %v1469
      %v1634 = vunpack.c.l.b16 %v1470
      %v1635 = vunpack.c.l.b16 %v1471
      %v1636 = vunpack.c.l.b16 %v1472
      %v1637 = vunpack.c.l.b16 %v1473
      %v1638 = vunpack.c.l.b16 %v1474
      %v1639 = vunpack.c.l.b16 %v1475
      %v1640 = vunpack.c.l.b16 %v1476
      %v1641 = vunpack.c.l.b16 %v1477
      %v1642 = vunpack.c.l.b16 %v1478
      %v1643 = vunpack.c.l.b16 %v1479
      %v1644 = vunpack.c.l.b16 %v1480
      %v1645 = vunpack.c.l.b16 %v1481
      %v1646 = vunpack.c.l.b16 %v1482
      %v1647 = vunpack.c.l.b16 %v1483
      %v1648 = vunpack.c.l.b16 %v1484
      %v1649 = vunpack.c.l.b16 %v1485
      %v1650 = vunpack.c.l.b16 %v1486
      %v1651 = vunpack.c.l.b16 %v1487
      %v1652 = vpack.c.b16 %v1605, %v1604
      %v1653 = vpack.c.b16 %v1607, %v1606
      %v1654 = vpack.c.b16 %v1609, %v1608
      %v1655 = vpack.c.b16 %v1611, %v1610
      %v1656 = vpack.c.b16 %v1613, %v1612
      %v1657 = vpack.c.b16 %v1615, %v1614
      %v1658 = vpack.c.b16 %v1617, %v1616
      %v1659 = vpack.c.b16 %v1619, %v1618
      %v1660 = vpack.c.b16 %v1621, %v1620
      %v1661 = vpack.c.b16 %v1623, %v1622
      %v1662 = vpack.c.b16 %v1625, %v1624
      %v1663 = vpack.c.b16 %v1627, %v1626
      %v1664 = vpack.c.b16 %v1629, %v1628
      %v1665 = vpack.c.b16 %v1631, %v1630
      %v1666 = vpack.c.b16 %v1633, %v1632
      %v1667 = vpack.c.b16 %v1635, %v1634
      %v1668 = vpack.c.b16 %v1637, %v1636
      %v1669 = vpack.c.b16 %v1639, %v1638
      %v1670 = vpack.c.b16 %v1641, %v1640
      %v1671 = vpack.c.b16 %v1643, %v1642
      %v1672 = vpack.c.b16 %v1645, %v1644
      %v1673 = vpack.c.b16 %v1647, %v1646
      %v1674 = vpack.c.b16 %v1649, %v1648
      %v1675 = vpack.c.b16 %v1651, %v1650
      %1700 = vmatprep.subr.bf16.mxu0 0
      %1701 = vmatpush1.bf16.msra.mxu0 %v1652
      %1702 = vmatprep.subr.bf16.mxu0 0
      %1703 = vmatpush1.bf16.msra.mxu0 %v1653
      %1704 = vmatprep.subr.bf16.mxu0 0
      %1705 = vmatpush1.bf16.msra.mxu0 %v1654
      %1706 = vmatprep.subr.bf16.mxu0 0
      %1707 = vmatpush1.bf16.msra.mxu0 %v1655
      %1708 = vmatprep.subr.bf16.mxu0 0
      %1709 = vmatpush1.bf16.msra.mxu0 %v1656
      %1710 = vmatprep.subr.bf16.mxu0 0
      %1711 = vmatpush1.bf16.msra.mxu0 %v1657
      %1712 = vmatprep.subr.bf16.mxu0 0
      %1713 = vmatpush1.bf16.msra.mxu0 %v1658
      %1714 = vmatprep.subr.bf16.mxu0 0
      %1715 = vmatpush1.bf16.msra.mxu0 %v1659
      %1716 = vmatprep.subr.bf16.mxu0 0
      %1717 = vmatpush1.bf16.msra.mxu0 %v1660
      %1718 = vmatprep.subr.bf16.mxu0 0
      %1719 = vmatpush1.bf16.msra.mxu0 %v1661
      %1720 = vmatprep.subr.bf16.mxu0 0
      %1721 = vmatpush1.bf16.msra.mxu0 %v1662
      %1722 = vmatprep.subr.bf16.mxu0 0
      %1723 = vmatpush1.bf16.msra.mxu0 %v1663
      %1724 = vmatprep.subr.bf16.mxu0 0
      %1725 = vmatpush1.bf16.msra.mxu0 %v1664
      %1726 = vmatprep.subr.bf16.mxu0 0
      %1727 = vmatpush1.bf16.msra.mxu0 %v1665
      %1728 = vmatprep.subr.bf16.mxu0 0
      %1729 = vmatpush1.bf16.msra.mxu0 %v1666
      %1730 = vmatprep.subr.bf16.mxu0 0
      %1731 = vmatpush1.bf16.msra.mxu0 %v1667
      %1732 = vmatprep.mubr.bf16.mxu0 %v1539
      %1733 = vmatmul.mubr.bf16.gmra.mrb[0].mxu0 %v1538
      %v1734 = vpop.f32.mrb[0].mxu0
      %v1735 = vadd.f32 %v1554, %v1734
      %v1736 = vpop.f32.mrb[0].mxu0
      %v1737 = vpop.f32.mrb[0].mxu0
      %v1738 = vadd.f32 %v1554, %v1737
      %v1739 = vpop.f32.mrb[0].mxu0
      %1740 = vmatprep.mubr.bf16.mxu0 %v1542
      %1741 = vmatmul.mubr.bf16.gmra.mrb[0].mxu0 %v1541
      %v1742 = vpop.f32.mrb[0].mxu0
      %v1743 = vadd.f32 %v1554, %v1742
      %v1744 = vpop.f32.mrb[0].mxu0
      %v1745 = vpop.f32.mrb[0].mxu0
      %v1746 = vadd.f32 %v1554, %v1745
      %v1747 = vpop.f32.mrb[0].mxu0
      %1748 = vmatprep.mubr.bf16.mxu0 %v1545
      %1749 = vmatmul.mubr.bf16.gmra.mrb[0].mxu0 %v1544
      %v1750 = vpop.f32.mrb[0].mxu0
      %v1751 = vadd.f32 %v1554, %v1750
      %v1752 = vpop.f32.mrb[0].mxu0
      %v1753 = vpop.f32.mrb[0].mxu0
      %v1754 = vadd.f32 %v1554, %v1753
      %v1755 = vpop.f32.mrb[0].mxu0
      %1756 = vmatprep.mubr.bf16.mxu0 %v1548
      %1757 = vmatmul.mubr.bf16.gmra.mrb[0].mxu0 %v1547
      %v1758 = vpop.f32.mrb[0].mxu0
      %v1759 = vadd.f32 %v1554, %v1758
      %v1760 = vpop.f32.mrb[0].mxu0
      %v1761 = vpop.f32.mrb[0].mxu0
      %v1762 = vadd.f32 %v1554, %v1761
      %v1763 = vpop.f32.mrb[0].mxu0
      %1764 = vdwg.mxu0
      %1765 = vmatprep.subr.bf16.mxu0 0
      %1766 = vmatpush1.bf16.msra.mxu0 %v1668
      %1767 = vmatprep.subr.bf16.mxu0 0
      %1768 = vmatpush1.bf16.msra.mxu0 %v1669
      %1769 = vmatprep.subr.bf16.mxu0 0
      %1770 = vmatpush1.bf16.msra.mxu0 %v1670
      %1771 = vmatprep.subr.bf16.mxu0 0
      %1772 = vmatpush1.bf16.msra.mxu0 %v1671
      %1773 = vmatprep.subr.bf16.mxu0 0
      %1774 = vmatpush1.bf16.msra.mxu0 %v1672
      %1775 = vmatprep.subr.bf16.mxu0 0
      %1776 = vmatpush1.bf16.msra.mxu0 %v1673
      %1777 = vmatprep.subr.bf16.mxu0 0
      %1778 = vmatpush1.bf16.msra.mxu0 %v1674
      %1779 = vmatprep.subr.bf16.mxu0 0
      %1780 = vmatpush1.bf16.msra.mxu0 %v1675
      %1781 = vmatprep.subr.bf16.mxu0 0
      %1782 = vmatpush1.bf16.msra.mxu0 0
      %1783 = vmatprep.subr.bf16.mxu0 0
      %1784 = vmatpush1.bf16.msra.mxu0 0
      %1785 = vmatprep.subr.bf16.mxu0 0
      %1786 = vmatpush1.bf16.msra.mxu0 0
      %1787 = vmatprep.subr.bf16.mxu0 0
      %1788 = vmatpush1.bf16.msra.mxu0 0
      %1789 = vmatprep.subr.bf16.mxu0 0
      %1790 = vmatpush1.bf16.msra.mxu0 0
      %1791 = vmatprep.subr.bf16.mxu0 0
      %1792 = vmatpush1.bf16.msra.mxu0 0
      %1793 = vmatprep.subr.bf16.mxu0 0
      %1794 = vmatpush1.bf16.msra.mxu0 0
      %1795 = vmatprep.subr.bf16.mxu0 0
      %1796 = vmatpush1.bf16.msra.mxu0 0
      %1797 = vmatprep.mubr.bf16.mxu0 0
      %1798 = vmatmul.mubr.bf16.gmra.mrb[0].mxu0 %v1540
      %v1799 = vpop.f32.mrb[0].mxu0
      %v1800 = vadd.f32 %v1735, %v1799
      %v1801 = vpop.f32.mrb[0].mxu0
      %v1802 = vpop.f32.mrb[0].mxu0
      %v1803 = vadd.f32 %v1738, %v1802
      %v1804 = vpop.f32.mrb[0].mxu0
      %1805 = vmatprep.mubr.bf16.mxu0 0
      %1806 = vmatmul.mubr.bf16.gmra.mrb[0].mxu0 %v1543
      %v1807 = vpop.f32.mrb[0].mxu0
      %v1808 = vadd.f32 %v1743, %v1807
      %v1809 = vpop.f32.mrb[0].mxu0
      %v1810 = vpop.f32.mrb[0].mxu0
      %v1811 = vadd.f32 %v1746, %v1810
      %v1812 = vpop.f32.mrb[0].mxu0
      %1813 = vmatprep.mubr.bf16.mxu0 0
      %1814 = vmatmul.mubr.bf16.gmra.mrb[0].mxu0 %v1546
      %v1815 = vpop.f32.mrb[0].mxu0
      %v1816 = vadd.f32 %v1751, %v1815
      %v1817 = vpop.f32.mrb[0].mxu0
      %v1818 = vpop.f32.mrb[0].mxu0
      %v1819 = vadd.f32 %v1754, %v1818
      %v1820 = vpop.f32.mrb[0].mxu0
      %1821 = vmatprep.mubr.bf16.mxu0 0
      %1822 = vmatmul.mubr.bf16.gmra.mrb[0].mxu0 %v1549
      %v1823 = vpop.f32.mrb[0].mxu0
      %v1824 = vadd.f32 %v1759, %v1823
      %v1825 = vpop.f32.mrb[0].mxu0
      %v1826 = vpop.f32.mrb[0].mxu0
      %v1827 = vadd.f32 %v1762, %v1826
      %v1828 = vpop.f32.mrb[0].mxu0
      %1829 = vdwg.mxu0
      %v1830 = vadd.f32 %v1032, %v1800
      %v1831 = vadd.f32 %v1033, %v1803
      %v1832 = vadd.f32 %v1034, %v1808
      %v1833 = vadd.f32 %v1035, %v1811
      %v1834 = vadd.f32 %v1036, %v1816
      %v1835 = vadd.f32 %v1037, %v1819
      %v1836 = vadd.f32 %v1038, %v1824
      %v1837 = vadd.f32 %v1039, %v1827
      %1838 = vst [vmem:[%s226] sm:$0xff] %v1830
      %1839 = vst [vmem:[%s226 + $0x8] sm:$0xff] %v1831
      %1840 = vst [vmem:[%s226 + $0x10] sm:$0xff] %v1832
      %1841 = vst [vmem:[%s226 + $0x18] sm:$0xff] %v1833
      %1842 = vst [vmem:[%s226 + $0x20] sm:$0xff] %v1834
      %1843 = vst [vmem:[%s226 + $0x28] sm:$0xff] %v1835
      %1844 = vst [vmem:[%s226 + $0x30] sm:$0xff] %v1836
      %1845 = vst [vmem:[%s226 + $0x38] sm:$0xff] %v1837
      %s1846 = smul.u32 8, %s16
      %p1847 = scmp.lt.s32.totalorder %s1846, 15
      %s1848 = scalar_select %p1847, %s1846, 15
      %s1849 = smul.addr %s1848, 8
      %s1850 = scalar_lea.vmem %s5, %s1849
      // Predicated region
      $region41: #{projnet_m_forward.1} parent=39 // pred_check
        %p1851 = pneg %p144
      $region42: #{projnet_m_forward.1} parent=39 // pred_check_branch
        %1853 = sbr.rel (%p1851) target = $region44
      $region43: #{projnet_m_forward.1} parent=39 // pred_region
        %s1854 = smul.u32 8, %s16
      $region44: #{projnet_m_forward.1} parent=39 // pred_fallthru
        _
    $region40: #{projnet_m_forward.1} parent=5 // pred_fallthru
      _
    %p1855 = scmp.le.s32.totalorder 2, %s11
    // Predicated region
    $region45: #{projnet_m_forward.1} parent=5 // pred_check
      %p1856 = pneg %p1855
    $region46: #{projnet_m_forward.1} parent=5 // pred_check_branch
      %1858 = sbr.rel (%p1856) target = $region48
    $region47: #{projnet_m_forward.1} parent=5 // pred_region
      %s1859 = ssub.s32 %s11, 2
      // Predicated region
      $region49: #{projnet_m_forward.1} parent=47 // pred_check
        %p1860 = pneg %p150
      $region50: #{projnet_m_forward.1} parent=47 // pred_check_branch
        %1862 = sbr.rel (%p1860) target = $region52
      $region51: #{projnet_m_forward.1} parent=47 // pred_region
        %s1863 = smul.u32 8, %s17
        %p1864 = scmp.lt.s32.totalorder %s1863, 15
        %s1865 = scalar_select %p1864, %s1863, 15
        %s1866 = smul.addr %s1865, 8
        %s1867 = scalar_lea.vmem %s5, %s1866
      $region52: #{projnet_m_forward.1} parent=47 // pred_fallthru
        _
    $region48: #{projnet_m_forward.1} parent=5 // pred_fallthru
      _
  $region6: #{projnet_m_forward.1} parent=0 // loop_footer
    %s15 = sadd.s32 1, %s11
  $region7: #{projnet_m_forward.1} parent=0 // loop_footer_branch
    %10 = sbr.rel target = $region3
  $region8: #{projnet_m_forward.1} parent=0 // loop_exit
    _

</llo_original>
